<compile_context>
chip_gen: v7x
topology: tpu7x:2x2x1
jax: 0.10.0
libtpu: 0.0.40
codegen_flags: <defaults>
</compile_context>

<pallas_src>
import math

import jax
import jax.numpy as jnp
from jax import lax
from jax.experimental import pallas as pl
from jax.experimental.pallas import tpu as pltpu

GROUPS = (2, 4, 8)


# ---------------------------------------------------------------------------
# Pallas kernel: one (branch, batch-chunk) block of the grouped double conv.
# ---------------------------------------------------------------------------
def _spepy_branch_kernel(x_ref, w1_ref, b1_ref, w2_ref, b2_ref, o_ref,
                         xpad_ref, midpad_ref, acc_ref):
    # x_ref:    (1, NB, H, W*Cin)       bf16 lane-dense image slabs
    # w1_ref:   (1, 3, W*Cin, W*Cmid)   bf16 banded weights (dy on axis 1)
    # b1_ref:   (1, 1, W*Cmid)          f32 (bias tiled over W)
    # w2_ref:   (1, 3, W*Cmid, W*Cout)  bf16 banded weights
    # b2_ref:   (1, 1, W*Cout)          f32
    # o_ref:    (1, NB, H, W*Cout)      f32
    # xpad_ref:   VMEM (NB*(H+2)+1, W*Cin)  bf16  zero-separated padded slab
    # midpad_ref: VMEM (NB*(H+2)+1, W*Cmid) bf16
    # acc_ref:    VMEM (NB*(H+2)-1, W*Cout) f32   (W*Cmid == W*Cout here)
    NB = x_ref.shape[1]
    H = x_ref.shape[2]
    WCmid = w1_ref.shape[3]
    WCout = o_ref.shape[3]
    S = H + 2                   # per-image row stride in the padded slab (even)
    Macc = NB * S - 1           # matmul M: covers all image rows (+ skipped gaps)

    # ---- conv1: build zero-padded slab (images at rows nS+2 .. nS+H+1) ----
    xpad_ref[...] = jnp.zeros_like(xpad_ref)
    for n in range(NB):
        xpad_ref[n * S + 2:n * S + 2 + H, :] = x_ref[0, n]

    # acc[j] = bias + sum_dy xpad[j+dy] @ B1[dy]   (output for padded row j+1)
    acc_ref[...] = jnp.broadcast_to(b1_ref[0], (Macc, WCmid))
    for dy in range(3):
        acc_ref[...] += jnp.dot(xpad_ref[dy:dy + Macc, :], w1_ref[0, dy],
                                preferred_element_type=jnp.float32)

    # ---- LeakyReLU(0.2) + re-pad mid activations (skip separator rows) ----
    midpad_ref[...] = jnp.zeros_like(midpad_ref)
    for n in range(NB):
        a = acc_ref[n * S + 1:n * S + 1 + H, :]
        midpad_ref[n * S + 2:n * S + 2 + H, :] = (
            jnp.maximum(a, 0.2 * a).astype(jnp.bfloat16))

    # ---- conv2 ----
    acc_ref[...] = jnp.broadcast_to(b2_ref[0], (Macc, WCout))
    for dy in range(3):
        acc_ref[...] += jnp.dot(midpad_ref[dy:dy + Macc, :], w2_ref[0, dy],
                                preferred_element_type=jnp.float32)

    # ---- LeakyReLU(0.2) + lane-dense output stores (per image) ----
    for n in range(NB):
        a = acc_ref[n * S + 1:n * S + 1 + H, :]
        o_ref[0, n] = jnp.maximum(a, 0.2 * a).astype(o_ref.dtype)


def _pick_batch_tile(N, H, target_m=128):
    """Largest divisor NB of N with matmul M = NB*(H+2)-1 <= target_m.
    128 is safe for the MXU / vreg budget on v5e; v6e/v7x tolerate more."""
    best = 1
    for nb in range(1, N + 1):
        if N % nb == 0 and nb * (H + 2) - 1 <= target_m:
            best = nb
    return best


def _spepy_pallas(x_all, B1, b1f, B2, b2f, NB):
    R, N, H, WCin = x_all.shape
    WCmid = B1.shape[-1]
    WCout = B2.shape[-1]
    assert WCmid == WCout  # 2C -> 2C second conv: accumulator scratch is reused
    S = H + 2
    return pl.pallas_call(
        _spepy_branch_kernel,
        out_shape=jax.ShapeDtypeStruct((R, N, H, WCout), jnp.float32),
        grid_spec=pltpu.PrefetchScalarGridSpec(
            num_scalar_prefetch=0,
            grid=(R, N // NB),
            in_specs=[
                pl.BlockSpec((1, NB, H, WCin), lambda r, n: (r, n, 0, 0)),
                pl.BlockSpec((1, 3, WCin, WCmid), lambda r, n: (r, 0, 0, 0)),
                pl.BlockSpec((1, 1, WCmid), lambda r, n: (r, 0, 0)),
                pl.BlockSpec((1, 3, WCmid, WCout), lambda r, n: (r, 0, 0, 0)),
                pl.BlockSpec((1, 1, WCout), lambda r, n: (r, 0, 0)),
            ],
            out_specs=pl.BlockSpec((1, NB, H, WCout), lambda r, n: (r, n, 0, 0)),
            scratch_shapes=[
                pltpu.VMEM((NB * S + 1, WCin), jnp.bfloat16),
                pltpu.VMEM((NB * S + 1, WCmid), jnp.bfloat16),
                pltpu.VMEM((NB * S - 1, WCout), jnp.float32),
            ],
        ),
        # Both axes are independent; weights re-DMA only when the branch changes.
        compiler_params=pltpu.CompilerParams(
            dimension_semantics=("parallel", "parallel")),
    )(x_all, B1, b1f, B2, b2f)


# ---------------------------------------------------------------------------
# Weight preparation (plain JAX) — hoisted out of the per-forward hot path.
# ---------------------------------------------------------------------------
def _grouped_oihw_to_dense_hwio(w_oihw, groups):
    """PyTorch grouped weight (Cout, Cin/g, 3, 3) -> dense block-diag HWIO."""
    Cout, cin_g, KH, KW = w_oihw.shape
    Cin = cin_g * groups
    cout_g = Cout // groups
    dense = jnp.zeros((KH, KW, Cin, Cout), w_oihw.dtype)
    for g in range(groups):
        wg = jnp.transpose(w_oihw[g * cout_g:(g + 1) * cout_g], (2, 3, 1, 0))
        dense = dense.at[:, :, g * cin_g:(g + 1) * cin_g,
                         g * cout_g:(g + 1) * cout_g].set(wg)
    return dense


def _banded_weight(dense_hwio, W):
    """(3,3,Cin,Cout) HWIO -> (3, W*Cin, W*Cout): per-dy banded matrix folding
    the 3 horizontal taps and the W zero-padding into the weights."""
    KH, KW, Cin, Cout = dense_hwio.shape
    dx = jnp.arange(KW).reshape(KW, 1, 1)
    wi = jnp.arange(W).reshape(1, W, 1)
    wo = jnp.arange(W).reshape(1, 1, W)
    shift = (wi == wo + dx - 1).astype(dense_hwio.dtype)      # (KW, W, W)
    band = jnp.einsum('xab,yxio->yaibo', shift, dense_hwio)   # (KH, W, Cin, W, Cout)
    return band.reshape(KH, W * Cin, W * Cout)


def prepare_spepy_params(params, W):
    """Build the banded bf16 weights / tiled f32 biases ONCE per parameter set."""
    B1s, B2s, b1s, b2s = [], [], [], []
    for p, g in zip(params, GROUPS):
        d1 = _grouped_oihw_to_dense_hwio(p['w1'], g)
        d2 = _grouped_oihw_to_dense_hwio(p['w2'], g)
        B1s.append(_banded_weight(d1, W))
        B2s.append(_banded_weight(d2, W))
        b1s.append(jnp.tile(p['b1'], W)[None, :])
        b2s.append(jnp.tile(p['b2'], W)[None, :])
    return {
        'B1': jnp.stack(B1s, 0).astype(jnp.bfloat16),   # (3, 3, W*C,  W*2C)
        'B2': jnp.stack(B2s, 0).astype(jnp.bfloat16),   # (3, 3, W*2C, W*2C)
        'b1': jnp.stack(b1s, 0).astype(jnp.float32),    # (3, 1, W*2C)
        'b2': jnp.stack(b2s, 0).astype(jnp.float32),    # (3, 1, W*2C)
    }


# ---------------------------------------------------------------------------
# Full SpePyBlock.forward: three NCHW inputs -> three NCHW outputs
# ---------------------------------------------------------------------------
def spepy_block_forward(x2, x4, x8, prepared):
    c = x2.shape[1]
    if c % 8 != 0:
        # Channel-replication pad exactly as in the PyTorch forward (only
        # consistent when the conv weights were built for the padded count).
        sl = slice(c - (8 - c % 8) - 1, c - 1)
        x2 = jnp.concatenate([x2, x2[:, sl]], axis=1)
        x4 = jnp.concatenate([x4, x4[:, sl]], axis=1)
        x8 = jnp.concatenate([x8, x8[:, sl]], axis=1)

    N, C, H, W = x2.shape
    # NCHW -> (branch, N, H, W*C) lane-dense bf16 slabs.
    # TODO(synk): if the surrounding graph can carry activations in this layout,
    # elide these transposes (each is an extra HBM round trip outside the kernel).
    x_all = jnp.stack([x2, x4, x8], axis=0)
    x_all = jnp.transpose(x_all, (0, 1, 3, 4, 2)).reshape(3, N, H, W * C)
    x_all = x_all.astype(jnp.bfloat16)

    NB = _pick_batch_tile(N, H)
    y = _spepy_pallas(x_all, prepared['B1'], prepared['b1'],
                      prepared['B2'], prepared['b2'], NB)   # (3, N, H, W*2C) f32
    Cout = prepared['B2'].shape[-1] // W
    y = y.reshape(3, N, H, W, Cout).transpose(0, 1, 4, 2, 3)   # -> NCHW
    return y[0], y[1], y[2]


# ---------------------------------------------------------------------------
# Deterministic parameter init (PyTorch Conv2d default-style uniform bounds)
# ---------------------------------------------------------------------------
def init_params(key, inchannels):
    params = []
    keys = jax.random.split(key, 12)
    ki = 0
    for g in GROUPS:
        cin1_g = inchannels // g
        bnd1 = 1.0 / math.sqrt(cin1_g * 9)
        w1 = jax.random.uniform(keys[ki], (2 * inchannels, cin1_g, 3, 3),
                                jnp.float32, -bnd1, bnd1); ki += 1
        b1 = jax.random.uniform(keys[ki], (2 * inchannels,), jnp.float32,
                                -bnd1, bnd1); ki += 1
        cin2_g = (2 * inchannels) // g
        bnd2 = 1.0 / math.sqrt(cin2_g * 9)
        w2 = jax.random.uniform(keys[ki], (2 * inchannels, cin2_g, 3, 3),
                                jnp.float32, -bnd2, bnd2); ki += 1
        b2 = jax.random.uniform(keys[ki], (2 * inchannels,), jnp.float32,
                                -bnd2, bnd2); ki += 1
        params.append({'w1': w1, 'b1': b1, 'w2': w2, 'b2': b2})
    return params


# ---------------------------------------------------------------------------
# Pure-JAX grouped-conv reference (exact f32) for correctness check
# ---------------------------------------------------------------------------
def _ref_branch(x_nchw, p, g):
    dn = ('NHWC', 'HWIO', 'NHWC')
    x = jnp.transpose(x_nchw, (0, 2, 3, 1))
    r1 = jnp.transpose(p['w1'], (2, 3, 1, 0))
    y = lax.conv_general_dilated(x, r1, (1, 1), 'SAME', dimension_numbers=dn,
                                 feature_group_count=g,
                                 precision=lax.Precision.HIGHEST) + p['b1']
    y = jnp.where(y >= 0, y, 0.2 * y)
    r2 = jnp.transpose(p['w2'], (2, 3, 1, 0))
    y = lax.conv_general_dilated(y, r2, (1, 1), 'SAME', dimension_numbers=dn,
                                 feature_group_count=g,
                                 precision=lax.Precision.HIGHEST) + p['b2']
    y = jnp.where(y >= 0, y, 0.2 * y)
    return jnp.transpose(y, (0, 3, 1, 2))


if __name__ == "__main__":
    key = jax.random.PRNGKey(0)
    kx2, kx4, kx8, kp = jax.random.split(key, 4)

    # inchannels = 8 (divisible by 8, as the module's channel-pad branch assumes)
    N, C, H, W = 2, 8, 16, 16
    x2 = jax.random.normal(kx2, (N, C, H, W), jnp.float32)   # NCHW, like PyTorch
    x4 = jax.random.normal(kx4, (N, C, H, W), jnp.float32)
    x8 = jax.random.normal(kx8, (N, C, H, W), jnp.float32)
    params = init_params(kp, C)

    # Weight prep runs ONCE (out of the hot path), forward is jitted.
    prepared = prepare_spepy_params(params, W)
    fwd = jax.jit(spepy_block_forward)

    y2, y4, y8 = fwd(x2, x4, x8, prepared)
    y2, y4, y8 = jax.block_until_ready((y2, y4, y8))
    assert y2.shape == (N, 2 * C, H, W), y2.shape
    assert y4.shape == (N, 2 * C, H, W), y4.shape
    assert y8.shape == (N, 2 * C, H, W), y8.shape

    # Correctness vs exact-f32 grouped-conv reference. The kernel uses bf16
    # matmul operands (f32 accumulation), so allow a bf16-sized tolerance;
    # any structural/indexing error would produce O(1) discrepancies.
    max_err = 0.0
    for x_in, y_out, g, p in zip((x2, x4, x8), (y2, y4, y8), GROUPS, params):
        ref = _ref_branch(x_in, p, g)
        max_err = max(max_err, float(jnp.max(jnp.abs(y_out - ref))))
    assert max_err < 5e-2, max_err

    print("KERNEL_OK")
</pallas_src>

<mosaic_0001>
module attributes {stable_mosaic.version = 11 : i64} {
  func.func @_spepy_branch_kernel(%arg0: i32, %arg1: i32, %arg2: memref<1x2x16x128xbf16, #tpu.memory_space<vmem>>, %arg3: memref<1x3x128x256xbf16, #tpu.memory_space<vmem>>, %arg4: memref<1x1x256xf32, #tpu.memory_space<vmem>>, %arg5: memref<1x3x256x256xbf16, #tpu.memory_space<vmem>>, %arg6: memref<1x1x256xf32, #tpu.memory_space<vmem>>, %arg7: memref<1x2x16x256xf32, #tpu.memory_space<vmem>>, %arg8: memref<37x128xbf16, #tpu.memory_space<vmem>>, %arg9: memref<37x256xbf16, #tpu.memory_space<vmem>>, %arg10: memref<35x256xf32, #tpu.memory_space<vmem>>) attributes {dimension_semantics = [#tpu.dimension_semantics<parallel>, #tpu.dimension_semantics<parallel>], iteration_bounds = array<i64: 3, 1>, scalar_prefetch = 0 : i64, scratch_operands = 3 : i64, tpu.core_type = #tpu.core_type<tc>, window_params = [{transform_indices = @transform_0, window_bounds = array<i64: 1, 2, 16, 128>}, {transform_indices = @transform_1, window_bounds = array<i64: 1, 3, 128, 256>}, {transform_indices = @transform_2, window_bounds = array<i64: 1, 1, 256>}, {transform_indices = @transform_3, window_bounds = array<i64: 1, 3, 256, 256>}, {transform_indices = @transform_4, window_bounds = array<i64: 1, 1, 256>}, {transform_indices = @transform_5, window_bounds = array<i64: 1, 2, 16, 256>}]} {
    %cst = arith.constant 0.000000e+00 : bf16
    %0 = vector.broadcast %cst : bf16 to vector<37x128xbf16>
    %c0 = arith.constant 0 : index
    %c0_0 = arith.constant 0 : index
    %1 = vector.load %arg8[%c0, %c0_0] : memref<37x128xbf16, #tpu.memory_space<vmem>>, vector<37x128xbf16>
    tpu.vector_store %arg8[%c0, %c0_0], %0 {strides = array<i32>} : memref<37x128xbf16, #tpu.memory_space<vmem>>, vector<37x128xbf16>,
    %c0_1 = arith.constant 0 : index
    %c0_2 = arith.constant 0 : index
    %c0_3 = arith.constant 0 : index
    %c0_4 = arith.constant 0 : index
    %2 = vector.load %arg2[%c0_1, %c0_2, %c0_3, %c0_4] : memref<1x2x16x128xbf16, #tpu.memory_space<vmem>>, vector<1x1x16x128xbf16>
    %3 = vector.shape_cast %2 : vector<1x1x16x128xbf16> to vector<16x128xbf16>
    %c2 = arith.constant 2 : index
    %c0_5 = arith.constant 0 : index
    %4 = vector.load %arg8[%c2, %c0_5] : memref<37x128xbf16, #tpu.memory_space<vmem>>, vector<16x128xbf16>
    tpu.vector_store %arg8[%c2, %c0_5], %3 {strides = array<i32>} : memref<37x128xbf16, #tpu.memory_space<vmem>>, vector<16x128xbf16>,
    %c0_6 = arith.constant 0 : index
    %c1 = arith.constant 1 : index
    %c0_7 = arith.constant 0 : index
    %c0_8 = arith.constant 0 : index
    %5 = vector.load %arg2[%c0_6, %c1, %c0_7, %c0_8] : memref<1x2x16x128xbf16, #tpu.memory_space<vmem>>, vector<1x1x16x128xbf16>
    %6 = vector.shape_cast %5 : vector<1x1x16x128xbf16> to vector<16x128xbf16>
    %c20 = arith.constant 20 : index
    %c0_9 = arith.constant 0 : index
    %7 = vector.load %arg8[%c20, %c0_9] : memref<37x128xbf16, #tpu.memory_space<vmem>>, vector<16x128xbf16>
    tpu.vector_store %arg8[%c20, %c0_9], %6 {strides = array<i32>} : memref<37x128xbf16, #tpu.memory_space<vmem>>, vector<16x128xbf16>,
    %c0_10 = arith.constant 0 : index
    %c0_11 = arith.constant 0 : index
    %c0_12 = arith.constant 0 : index
    %8 = vector.load %arg4[%c0_10, %c0_11, %c0_12] : memref<1x1x256xf32, #tpu.memory_space<vmem>>, vector<1x1x256xf32>
    %9 = vector.shape_cast %8 : vector<1x1x256xf32> to vector<1x256xf32>
    %10 = vector.shape_cast %9 : vector<1x256xf32> to vector<1x256xf32>
    %11 = vector.broadcast %10 : vector<1x256xf32> to vector<35x256xf32>
    %c0_13 = arith.constant 0 : index
    %c0_14 = arith.constant 0 : index
    %12 = vector.load %arg10[%c0_13, %c0_14] : memref<35x256xf32, #tpu.memory_space<vmem>>, vector<35x256xf32>
    tpu.vector_store %arg10[%c0_13, %c0_14], %11 {strides = array<i32>} : memref<35x256xf32, #tpu.memory_space<vmem>>, vector<35x256xf32>,
    %c0_15 = arith.constant 0 : index
    %c0_16 = arith.constant 0 : index
    %13 = vector.load %arg10[%c0_15, %c0_16] : memref<35x256xf32, #tpu.memory_space<vmem>>, vector<35x256xf32>
    %c0_17 = arith.constant 0 : index
    %c0_18 = arith.constant 0 : index
    %14 = vector.load %arg8[%c0_17, %c0_18] : memref<37x128xbf16, #tpu.memory_space<vmem>>, vector<35x128xbf16>
    %c0_19 = arith.constant 0 : index
    %c0_20 = arith.constant 0 : index
    %c0_21 = arith.constant 0 : index
    %c0_22 = arith.constant 0 : index
    %15 = vector.load %arg3[%c0_19, %c0_20, %c0_21, %c0_22] : memref<1x3x128x256xbf16, #tpu.memory_space<vmem>>, vector<1x1x128x256xbf16>
    %16 = vector.shape_cast %15 : vector<1x1x128x256xbf16> to vector<128x256xbf16>
    %cst_23 = arith.constant dense<0.000000e+00> : vector<35x256xf32>
    %17 = tpu.matmul %14, %16, %cst_23 {dimension_numbers = #tpu.dot_dimension_numbers<[1], [0], [0], [1], [0, 0, 1, 1], [], []>} : vector<35x128xbf16>, vector<128x256xbf16>, vector<35x256xf32> -> vector<35x256xf32>
    %18 = arith.addf %13, %17 : vector<35x256xf32>
    %c0_24 = arith.constant 0 : index
    %c0_25 = arith.constant 0 : index
    %19 = vector.load %arg10[%c0_24, %c0_25] : memref<35x256xf32, #tpu.memory_space<vmem>>, vector<35x256xf32>
    tpu.vector_store %arg10[%c0_24, %c0_25], %18 {strides = array<i32>} : memref<35x256xf32, #tpu.memory_space<vmem>>, vector<35x256xf32>,
    %c0_26 = arith.constant 0 : index
    %c0_27 = arith.constant 0 : index
    %20 = vector.load %arg10[%c0_26, %c0_27] : memref<35x256xf32, #tpu.memory_space<vmem>>, vector<35x256xf32>
    %c1_28 = arith.constant 1 : index
    %c0_29 = arith.constant 0 : index
    %21 = vector.load %arg8[%c1_28, %c0_29] : memref<37x128xbf16, #tpu.memory_space<vmem>>, vector<35x128xbf16>
    %c0_30 = arith.constant 0 : index
    %c1_31 = arith.constant 1 : index
    %c0_32 = arith.constant 0 : index
    %c0_33 = arith.constant 0 : index
    %22 = vector.load %arg3[%c0_30, %c1_31, %c0_32, %c0_33] : memref<1x3x128x256xbf16, #tpu.memory_space<vmem>>, vector<1x1x128x256xbf16>
    %23 = vector.shape_cast %22 : vector<1x1x128x256xbf16> to vector<128x256xbf16>
    %cst_34 = arith.constant dense<0.000000e+00> : vector<35x256xf32>
    %24 = tpu.matmul %21, %23, %cst_34 {dimension_numbers = #tpu.dot_dimension_numbers<[1], [0], [0], [1], [0, 0, 1, 1], [], []>} : vector<35x128xbf16>, vector<128x256xbf16>, vector<35x256xf32> -> vector<35x256xf32>
    %25 = arith.addf %20, %24 : vector<35x256xf32>
    %c0_35 = arith.constant 0 : index
    %c0_36 = arith.constant 0 : index
    %26 = vector.load %arg10[%c0_35, %c0_36] : memref<35x256xf32, #tpu.memory_space<vmem>>, vector<35x256xf32>
    tpu.vector_store %arg10[%c0_35, %c0_36], %25 {strides = array<i32>} : memref<35x256xf32, #tpu.memory_space<vmem>>, vector<35x256xf32>,
    %c0_37 = arith.constant 0 : index
    %c0_38 = arith.constant 0 : index
    %27 = vector.load %arg10[%c0_37, %c0_38] : memref<35x256xf32, #tpu.memory_space<vmem>>, vector<35x256xf32>
    %c2_39 = arith.constant 2 : index
    %c0_40 = arith.constant 0 : index
    %28 = vector.load %arg8[%c2_39, %c0_40] : memref<37x128xbf16, #tpu.memory_space<vmem>>, vector<35x128xbf16>
    %c0_41 = arith.constant 0 : index
    %c2_42 = arith.constant 2 : index
    %c0_43 = arith.constant 0 : index
    %c0_44 = arith.constant 0 : index
    %29 = vector.load %arg3[%c0_41, %c2_42, %c0_43, %c0_44] : memref<1x3x128x256xbf16, #tpu.memory_space<vmem>>, vector<1x1x128x256xbf16>
    %30 = vector.shape_cast %29 : vector<1x1x128x256xbf16> to vector<128x256xbf16>
    %cst_45 = arith.constant dense<0.000000e+00> : vector<35x256xf32>
    %31 = tpu.matmul %28, %30, %cst_45 {dimension_numbers = #tpu.dot_dimension_numbers<[1], [0], [0], [1], [0, 0, 1, 1], [], []>} : vector<35x128xbf16>, vector<128x256xbf16>, vector<35x256xf32> -> vector<35x256xf32>
    %32 = arith.addf %27, %31 : vector<35x256xf32>
    %c0_46 = arith.constant 0 : index
    %c0_47 = arith.constant 0 : index
    %33 = vector.load %arg10[%c0_46, %c0_47] : memref<35x256xf32, #tpu.memory_space<vmem>>, vector<35x256xf32>
    tpu.vector_store %arg10[%c0_46, %c0_47], %32 {strides = array<i32>} : memref<35x256xf32, #tpu.memory_space<vmem>>, vector<35x256xf32>,
    %cst_48 = arith.constant 0.000000e+00 : bf16
    %34 = vector.broadcast %cst_48 : bf16 to vector<37x256xbf16>
    %c0_49 = arith.constant 0 : index
    %c0_50 = arith.constant 0 : index
    %35 = vector.load %arg9[%c0_49, %c0_50] : memref<37x256xbf16, #tpu.memory_space<vmem>>, vector<37x256xbf16>
    tpu.vector_store %arg9[%c0_49, %c0_50], %34 {strides = array<i32>} : memref<37x256xbf16, #tpu.memory_space<vmem>>, vector<37x256xbf16>,
    %c1_51 = arith.constant 1 : index
    %c0_52 = arith.constant 0 : index
    %36 = vector.load %arg10[%c1_51, %c0_52] : memref<35x256xf32, #tpu.memory_space<vmem>>, vector<16x256xf32>
    %cst_53 = arith.constant 2.000000e-01 : f32
    %37 = vector.broadcast %cst_53 : f32 to vector<16x256xf32>
    %38 = arith.mulf %37, %36 : vector<16x256xf32>
    %39 = arith.maximumf %36, %38 : vector<16x256xf32>
    %40 = arith.truncf %39 : vector<16x256xf32> to vector<16x256xbf16>
    %c2_54 = arith.constant 2 : index
    %c0_55 = arith.constant 0 : index
    %41 = vector.load %arg9[%c2_54, %c0_55] : memref<37x256xbf16, #tpu.memory_space<vmem>>, vector<16x256xbf16>
    tpu.vector_store %arg9[%c2_54, %c0_55], %40 {strides = array<i32>} : memref<37x256xbf16, #tpu.memory_space<vmem>>, vector<16x256xbf16>,
    %c19 = arith.constant 19 : index
    %c0_56 = arith.constant 0 : index
    %42 = vector.load %arg10[%c19, %c0_56] : memref<35x256xf32, #tpu.memory_space<vmem>>, vector<16x256xf32>
    %cst_57 = arith.constant 2.000000e-01 : f32
    %43 = vector.broadcast %cst_57 : f32 to vector<16x256xf32>
    %44 = arith.mulf %43, %42 : vector<16x256xf32>
    %45 = arith.maximumf %42, %44 : vector<16x256xf32>
    %46 = arith.truncf %45 : vector<16x256xf32> to vector<16x256xbf16>
    %c20_58 = arith.constant 20 : index
    %c0_59 = arith.constant 0 : index
    %47 = vector.load %arg9[%c20_58, %c0_59] : memref<37x256xbf16, #tpu.memory_space<vmem>>, vector<16x256xbf16>
    tpu.vector_store %arg9[%c20_58, %c0_59], %46 {strides = array<i32>} : memref<37x256xbf16, #tpu.memory_space<vmem>>, vector<16x256xbf16>,
    %c0_60 = arith.constant 0 : index
    %c0_61 = arith.constant 0 : index
    %c0_62 = arith.constant 0 : index
    %48 = vector.load %arg6[%c0_60, %c0_61, %c0_62] : memref<1x1x256xf32, #tpu.memory_space<vmem>>, vector<1x1x256xf32>
    %49 = vector.shape_cast %48 : vector<1x1x256xf32> to vector<1x256xf32>
    %50 = vector.shape_cast %49 : vector<1x256xf32> to vector<1x256xf32>
    %51 = vector.broadcast %50 : vector<1x256xf32> to vector<35x256xf32>
    %c0_63 = arith.constant 0 : index
    %c0_64 = arith.constant 0 : index
    %52 = vector.load %arg10[%c0_63, %c0_64] : memref<35x256xf32, #tpu.memory_space<vmem>>, vector<35x256xf32>
    tpu.vector_store %arg10[%c0_63, %c0_64], %51 {strides = array<i32>} : memref<35x256xf32, #tpu.memory_space<vmem>>, vector<35x256xf32>,
    %c0_65 = arith.constant 0 : index
    %c0_66 = arith.constant 0 : index
    %53 = vector.load %arg10[%c0_65, %c0_66] : memref<35x256xf32, #tpu.memory_space<vmem>>, vector<35x256xf32>
    %c0_67 = arith.constant 0 : index
    %c0_68 = arith.constant 0 : index
    %54 = vector.load %arg9[%c0_67, %c0_68] : memref<37x256xbf16, #tpu.memory_space<vmem>>, vector<35x256xbf16>
    %c0_69 = arith.constant 0 : index
    %c0_70 = arith.constant 0 : index
    %c0_71 = arith.constant 0 : index
    %c0_72 = arith.constant 0 : index
    %55 = vector.load %arg5[%c0_69, %c0_70, %c0_71, %c0_72] : memref<1x3x256x256xbf16, #tpu.memory_space<vmem>>, vector<1x1x256x256xbf16>
    %56 = vector.shape_cast %55 : vector<1x1x256x256xbf16> to vector<256x256xbf16>
    %cst_73 = arith.constant dense<0.000000e+00> : vector<35x256xf32>
    %57 = tpu.matmul %54, %56, %cst_73 {dimension_numbers = #tpu.dot_dimension_numbers<[1], [0], [0], [1], [0, 0, 1, 1], [], []>} : vector<35x256xbf16>, vector<256x256xbf16>, vector<35x256xf32> -> vector<35x256xf32>
    %58 = arith.addf %53, %57 : vector<35x256xf32>
    %c0_74 = arith.constant 0 : index
    %c0_75 = arith.constant 0 : index
    %59 = vector.load %arg10[%c0_74, %c0_75] : memref<35x256xf32, #tpu.memory_space<vmem>>, vector<35x256xf32>
    tpu.vector_store %arg10[%c0_74, %c0_75], %58 {strides = array<i32>} : memref<35x256xf32, #tpu.memory_space<vmem>>, vector<35x256xf32>,
    %c0_76 = arith.constant 0 : index
    %c0_77 = arith.constant 0 : index
    %60 = vector.load %arg10[%c0_76, %c0_77] : memref<35x256xf32, #tpu.memory_space<vmem>>, vector<35x256xf32>
    %c1_78 = arith.constant 1 : index
    %c0_79 = arith.constant 0 : index
    %61 = vector.load %arg9[%c1_78, %c0_79] : memref<37x256xbf16, #tpu.memory_space<vmem>>, vector<35x256xbf16>
    %c0_80 = arith.constant 0 : index
    %c1_81 = arith.constant 1 : index
    %c0_82 = arith.constant 0 : index
    %c0_83 = arith.constant 0 : index
    %62 = vector.load %arg5[%c0_80, %c1_81, %c0_82, %c0_83] : memref<1x3x256x256xbf16, #tpu.memory_space<vmem>>, vector<1x1x256x256xbf16>
    %63 = vector.shape_cast %62 : vector<1x1x256x256xbf16> to vector<256x256xbf16>
    %cst_84 = arith.constant dense<0.000000e+00> : vector<35x256xf32>
    %64 = tpu.matmul %61, %63, %cst_84 {dimension_numbers = #tpu.dot_dimension_numbers<[1], [0], [0], [1], [0, 0, 1, 1], [], []>} : vector<35x256xbf16>, vector<256x256xbf16>, vector<35x256xf32> -> vector<35x256xf32>
    %65 = arith.addf %60, %64 : vector<35x256xf32>
    %c0_85 = arith.constant 0 : index
    %c0_86 = arith.constant 0 : index
    %66 = vector.load %arg10[%c0_85, %c0_86] : memref<35x256xf32, #tpu.memory_space<vmem>>, vector<35x256xf32>
    tpu.vector_store %arg10[%c0_85, %c0_86], %65 {strides = array<i32>} : memref<35x256xf32, #tpu.memory_space<vmem>>, vector<35x256xf32>,
    %c0_87 = arith.constant 0 : index
    %c0_88 = arith.constant 0 : index
    %67 = vector.load %arg10[%c0_87, %c0_88] : memref<35x256xf32, #tpu.memory_space<vmem>>, vector<35x256xf32>
    %c2_89 = arith.constant 2 : index
    %c0_90 = arith.constant 0 : index
    %68 = vector.load %arg9[%c2_89, %c0_90] : memref<37x256xbf16, #tpu.memory_space<vmem>>, vector<35x256xbf16>
    %c0_91 = arith.constant 0 : index
    %c2_92 = arith.constant 2 : index
    %c0_93 = arith.constant 0 : index
    %c0_94 = arith.constant 0 : index
    %69 = vector.load %arg5[%c0_91, %c2_92, %c0_93, %c0_94] : memref<1x3x256x256xbf16, #tpu.memory_space<vmem>>, vector<1x1x256x256xbf16>
    %70 = vector.shape_cast %69 : vector<1x1x256x256xbf16> to vector<256x256xbf16>
    %cst_95 = arith.constant dense<0.000000e+00> : vector<35x256xf32>
    %71 = tpu.matmul %68, %70, %cst_95 {dimension_numbers = #tpu.dot_dimension_numbers<[1], [0], [0], [1], [0, 0, 1, 1], [], []>} : vector<35x256xbf16>, vector<256x256xbf16>, vector<35x256xf32> -> vector<35x256xf32>
    %72 = arith.addf %67, %71 : vector<35x256xf32>
    %c0_96 = arith.constant 0 : index
    %c0_97 = arith.constant 0 : index
    %73 = vector.load %arg10[%c0_96, %c0_97] : memref<35x256xf32, #tpu.memory_space<vmem>>, vector<35x256xf32>
    tpu.vector_store %arg10[%c0_96, %c0_97], %72 {strides = array<i32>} : memref<35x256xf32, #tpu.memory_space<vmem>>, vector<35x256xf32>,
    %c1_98 = arith.constant 1 : index
    %c0_99 = arith.constant 0 : index
    %74 = vector.load %arg10[%c1_98, %c0_99] : memref<35x256xf32, #tpu.memory_space<vmem>>, vector<16x256xf32>
    %cst_100 = arith.constant 2.000000e-01 : f32
    %75 = vector.broadcast %cst_100 : f32 to vector<16x256xf32>
    %76 = arith.mulf %75, %74 : vector<16x256xf32>
    %77 = arith.maximumf %74, %76 : vector<16x256xf32>
    %c0_101 = arith.constant 0 : index
    %c0_102 = arith.constant 0 : index
    %c0_103 = arith.constant 0 : index
    %c0_104 = arith.constant 0 : index
    %78 = vector.load %arg7[%c0_101, %c0_102, %c0_103, %c0_104] : memref<1x2x16x256xf32, #tpu.memory_space<vmem>>, vector<1x1x16x256xf32>
    %79 = vector.shape_cast %78 : vector<1x1x16x256xf32> to vector<16x256xf32>
    %80 = vector.shape_cast %77 : vector<16x256xf32> to vector<1x1x16x256xf32>
    tpu.vector_store %arg7[%c0_101, %c0_102, %c0_103, %c0_104], %80 {strides = array<i32>} : memref<1x2x16x256xf32, #tpu.memory_space<vmem>>, vector<1x1x16x256xf32>,
    %c19_105 = arith.constant 19 : index
    %c0_106 = arith.constant 0 : index
    %81 = vector.load %arg10[%c19_105, %c0_106] : memref<35x256xf32, #tpu.memory_space<vmem>>, vector<16x256xf32>
    %cst_107 = arith.constant 2.000000e-01 : f32
    %82 = vector.broadcast %cst_107 : f32 to vector<16x256xf32>
    %83 = arith.mulf %82, %81 : vector<16x256xf32>
    %84 = arith.maximumf %81, %83 : vector<16x256xf32>
    %c0_108 = arith.constant 0 : index
    %c1_109 = arith.constant 1 : index
    %c0_110 = arith.constant 0 : index
    %c0_111 = arith.constant 0 : index
    %85 = vector.load %arg7[%c0_108, %c1_109, %c0_110, %c0_111] : memref<1x2x16x256xf32, #tpu.memory_space<vmem>>, vector<1x1x16x256xf32>
    %86 = vector.shape_cast %85 : vector<1x1x16x256xf32> to vector<16x256xf32>
    %87 = vector.shape_cast %84 : vector<16x256xf32> to vector<1x1x16x256xf32>
    tpu.vector_store %arg7[%c0_108, %c1_109, %c0_110, %c0_111], %87 {strides = array<i32>} : memref<1x2x16x256xf32, #tpu.memory_space<vmem>>, vector<1x1x16x256xf32>,
    return
  }
  func.func @transform_0(%arg0: i32, %arg1: i32) -> (i32, i32, i32, i32) {
    %c0_i32 = arith.constant 0 : i32
    %c0_i32_0 = arith.constant 0 : i32
    %c0_i32_1 = arith.constant 0 : i32
    return %arg0, %arg1, %c0_i32, %c0_i32_0 : i32, i32, i32, i32
  }
  func.func @transform_1(%arg0: i32, %arg1: i32) -> (i32, i32, i32, i32) {
    %c0_i32 = arith.constant 0 : i32
    %c0_i32_0 = arith.constant 0 : i32
    %c0_i32_1 = arith.constant 0 : i32
    %c0_i32_2 = arith.constant 0 : i32
    return %arg0, %c0_i32, %c0_i32_0, %c0_i32_1 : i32, i32, i32, i32
  }
  func.func @transform_2(%arg0: i32, %arg1: i32) -> (i32, i32, i32) {
    %c0_i32 = arith.constant 0 : i32
    %c0_i32_0 = arith.constant 0 : i32
    %c0_i32_1 = arith.constant 0 : i32
    return %arg0, %c0_i32, %c0_i32_0 : i32, i32, i32
  }
  func.func @transform_3(%arg0: i32, %arg1: i32) -> (i32, i32, i32, i32) {
    %c0_i32 = arith.constant 0 : i32
    %c0_i32_0 = arith.constant 0 : i32
    %c0_i32_1 = arith.constant 0 : i32
    %c0_i32_2 = arith.constant 0 : i32
    return %arg0, %c0_i32, %c0_i32_0, %c0_i32_1 : i32, i32, i32, i32
  }
  func.func @transform_4(%arg0: i32, %arg1: i32) -> (i32, i32, i32) {
    %c0_i32 = arith.constant 0 : i32
    %c0_i32_0 = arith.constant 0 : i32
    %c0_i32_1 = arith.constant 0 : i32
    return %arg0, %c0_i32, %c0_i32_0 : i32, i32, i32
  }
  func.func @transform_5(%arg0: i32, %arg1: i32) -> (i32, i32, i32, i32) {
    %c0_i32 = arith.constant 0 : i32
    %c0_i32_0 = arith.constant 0 : i32
    %c0_i32_1 = arith.constant 0 : i32
    return %arg0, %arg1, %c0_i32, %c0_i32_0 : i32, i32, i32, i32
  }
}

</mosaic_0001>

<llo_original>
// kernel: spepy_block_forward.1
$region0: #{spepy_block_forward.1}
  #allocation0 [shape = 'u32[]', space=smem, size = 0x4, offset = 0x4, fixed_abs, tag = 'smem constant byte address 0x4 - core index']
  #allocation1 [shape = 'u32[144,128]{1,0:T(1,128)}', space=vmem, size = 0x12000, scoped, tag = 'internal scratch']
  #allocation2 [shape = 'bf16[37,128]{1,0:T(8,128)(2,1)}', space=vmem, size = 0x2800, scoped, tag = 'scratch operand']
  #allocation3 [shape = 'bf16[37,256]{1,0:T(8,128)(2,1)}', space=vmem, size = 0x5000, scoped, tag = 'scratch operand']
  #allocation4 [shape = 'f32[35,256]{1,0:T(8,128)}', space=vmem, size = 0xa000, scoped, tag = 'scratch operand']
  %s0 = inlined_call_operand.vmem [shape: bf16[3,2,16,128], index: 0, kind: input, shape index: {}]
  %s1 = inlined_call_operand.hbm [shape: bf16[3,3,128,256], index: 1, kind: input, shape index: {}]
  %s2 = inlined_call_operand.vmem [shape: f32[3,1,256], index: 2, kind: input, shape index: {}]
  %s3 = inlined_call_operand.vmem [shape: bf16[3,3,256,256], index: 3, kind: input, shape index: {}]
  %s4 = inlined_call_operand.vmem [shape: f32[3,1,256], index: 4, kind: input, shape index: {}]
  %s5 = inlined_call_operand.vmem [shape: f32[3,2,16,256], index: 5, kind: output, shape index: {}]
  %s6 = sld [smem:[#allocation0]]
  $region57: #{spepy_block_forward.1} parent=0
    _
  %s8 = ssub.s32 1, %s6
  %s9 = scalar_select 0, %s8, %s6
  $region1: #{spepy_block_forward.1} parent=0
    #allocation5 [shape = 'u8[393216]{0}', space=vmem, size = 0x60000, scoped, tag = 'input window, operand 1']
    #allocation6 [shape = 's32[2]{0}', space=sflag, size = 0x8, scoped, tag = 'scoped memory for spepy_block_forward.1']
    %10 = vsyncpa [#allocation6], 0
    %s11 = scalar_lea.sflag [#allocation6], 1
    %12 = vsyncpa %s11, 0
    loop: start=0, step=1, limit=5
    $region2: #{spepy_block_forward.1} parent=1 // loop_pre_header
      _
    $region3: #{spepy_block_forward.1} parent=1 // loop_header
      %s14 = sphi 0, %s18
      %p15 = scmp.ge.s32.totalorder %s14, 5
      %s21 = sphi 0, %s33
      %s22 = sphi 0, %s29
      %s23 = sphi 0, %s21
      %s24 = sphi 0, %s22
      %s25 = sphi 0, %s23
      %s26 = sphi 0, %s24
      %s38 = sphi 0, %s40
      %s41 = sphi 0, %s38
      %s42 = sphi 0, %s41
      %s58 = sphi 0, %s42
      %s64 = sphi 0, %s66
      %s67 = sphi 0, %s64
      %s68 = sphi 0, %s67
      %s84 = sphi 0, %s68
      %s90 = sphi 0, %s92
      %s93 = sphi 0, %s90
      %s94 = sphi 0, %s93
      %s110 = sphi 0, %s94
      %s116 = sphi 0, %s118
      %s119 = sphi 0, %s116
      %s120 = sphi 0, %s119
      %s136 = sphi 0, %s120
      %s142 = sphi 0, %s144
      %s145 = sphi 0, %s142
      %s146 = sphi 0, %s145
      %s162 = sphi 0, %s146
      %s170 = sphi 0, %s172
      %s173 = sphi 0, %s170
      %s174 = sphi 0, %s173
      %s190 = sphi 0, %s174
    $region4: #{spepy_block_forward.1} parent=1 // loop_header_branch
      %17 = sbr.rel (%p15) target = $region8
    $region5: #{spepy_block_forward.1} parent=1 // loop_body
      %s19 = ssub.s32 %s14, 1
      %s20 = ssub.s32 %s14, 2
      %s27 = sadd.s32 1, %s22
      %p28 = scmp.ge.s32.totalorder %s27, 1
      %s29 = scalar_select %p28, 0, %s27
      %s30 = sadd.s32 1, %s21
      %s31 = scalar_select %p28, %s30, %s21
      %p32 = scmp.ge.s32.totalorder %s31, 3
      %s33 = scalar_select %p32, 0, %s31
      %s34 = ssub.s32 %s21, %s33
      %s35 = ssub.s32 %s22, %s29
      %s36 = sor.u32 %s34, %s35
      %p37 = scmp.eq.s32.totalorder %s36, 0
      %s39 = sadd.s32 %s38, 1
      %s40 = scalar_select %p37, %s38, %s39
      %p43 = pneg %p37
      %p44 = scmp.eq.s32.totalorder %s14, 2
      %p45 = por %p43, %p44
      %p46 = scmp.ne.s32.totalorder %s38, %s41
      %p47 = scmp.eq.s32.totalorder %s14, 0
      %p48 = por %p46, %p47
      %p49 = scmp.ne.s32.totalorder %s38, %s41
      %p50 = scmp.eq.s32.totalorder %s19, 2
      %p51 = por %p49, %p50
      %p52 = scmp.ne.s32.totalorder %s41, %s42
      %p53 = scmp.eq.s32.totalorder %s19, 0
      %p54 = por %p52, %p53
      %p55 = scmp.ne.s32.totalorder %s41, %s42
      %p56 = scmp.eq.s32.totalorder %s20, 2
      %p57 = por %p55, %p56
      %p59 = scmp.ne.s32.totalorder %s42, %s58
      %p60 = scmp.eq.s32.totalorder %s20, 0
      %p61 = por %p59, %p60
      %s62 = ssub.s32 %s21, %s33
      %p63 = scmp.eq.s32.totalorder %s62, 0
      %s65 = sadd.s32 %s64, 1
      %s66 = scalar_select %p63, %s64, %s65
      %p69 = pneg %p63
      %p70 = scmp.eq.s32.totalorder %s14, 2
      %p71 = por %p69, %p70
      %p72 = scmp.ne.s32.totalorder %s64, %s67
      %p73 = scmp.eq.s32.totalorder %s14, 0
      %p74 = por %p72, %p73
      %p75 = scmp.ne.s32.totalorder %s64, %s67
      %p76 = scmp.eq.s32.totalorder %s19, 2
      %p77 = por %p75, %p76
      %p78 = scmp.ne.s32.totalorder %s67, %s68
      %p79 = scmp.eq.s32.totalorder %s19, 0
      %p80 = por %p78, %p79
      %p81 = scmp.ne.s32.totalorder %s67, %s68
      %p82 = scmp.eq.s32.totalorder %s20, 2
      %p83 = por %p81, %p82
      %p85 = scmp.ne.s32.totalorder %s68, %s84
      %p86 = scmp.eq.s32.totalorder %s20, 0
      %p87 = por %p85, %p86
      %s88 = ssub.s32 %s21, %s33
      %p89 = scmp.eq.s32.totalorder %s88, 0
      %s91 = sadd.s32 %s90, 1
      %s92 = scalar_select %p89, %s90, %s91
      %p95 = pneg %p89
      %p96 = scmp.eq.s32.totalorder %s14, 2
      %p97 = por %p95, %p96
      %p98 = scmp.ne.s32.totalorder %s90, %s93
      %p99 = scmp.eq.s32.totalorder %s14, 0
      %p100 = por %p98, %p99
      %p101 = scmp.ne.s32.totalorder %s90, %s93
      %p102 = scmp.eq.s32.totalorder %s19, 2
      %p103 = por %p101, %p102
      %p104 = scmp.ne.s32.totalorder %s93, %s94
      %p105 = scmp.eq.s32.totalorder %s19, 0
      %p106 = por %p104, %p105
      %p107 = scmp.ne.s32.totalorder %s93, %s94
      %p108 = scmp.eq.s32.totalorder %s20, 2
      %p109 = por %p107, %p108
      %p111 = scmp.ne.s32.totalorder %s94, %s110
      %p112 = scmp.eq.s32.totalorder %s20, 0
      %p113 = por %p111, %p112
      %s114 = ssub.s32 %s21, %s33
      %p115 = scmp.eq.s32.totalorder %s114, 0
      %s117 = sadd.s32 %s116, 1
      %s118 = scalar_select %p115, %s116, %s117
      %p121 = pneg %p115
      %p122 = scmp.eq.s32.totalorder %s14, 2
      %p123 = por %p121, %p122
      %p124 = scmp.ne.s32.totalorder %s116, %s119
      %p125 = scmp.eq.s32.totalorder %s14, 0
      %p126 = por %p124, %p125
      %p127 = scmp.ne.s32.totalorder %s116, %s119
      %p128 = scmp.eq.s32.totalorder %s19, 2
      %p129 = por %p127, %p128
      %p130 = scmp.ne.s32.totalorder %s119, %s120
      %p131 = scmp.eq.s32.totalorder %s19, 0
      %p132 = por %p130, %p131
      %p133 = scmp.ne.s32.totalorder %s119, %s120
      %p134 = scmp.eq.s32.totalorder %s20, 2
      %p135 = por %p133, %p134
      %p137 = scmp.ne.s32.totalorder %s120, %s136
      %p138 = scmp.eq.s32.totalorder %s20, 0
      %p139 = por %p137, %p138
      %s140 = ssub.s32 %s21, %s33
      %p141 = scmp.eq.s32.totalorder %s140, 0
      %s143 = sadd.s32 %s142, 1
      %s144 = scalar_select %p141, %s142, %s143
      %p147 = pneg %p141
      %p148 = scmp.eq.s32.totalorder %s14, 2
      %p149 = por %p147, %p148
      %p150 = scmp.ne.s32.totalorder %s142, %s145
      %p151 = scmp.eq.s32.totalorder %s14, 0
      %p152 = por %p150, %p151
      %p153 = scmp.ne.s32.totalorder %s142, %s145
      %p154 = scmp.eq.s32.totalorder %s19, 2
      %p155 = por %p153, %p154
      %p156 = scmp.ne.s32.totalorder %s145, %s146
      %p157 = scmp.eq.s32.totalorder %s19, 0
      %p158 = por %p156, %p157
      %p159 = scmp.ne.s32.totalorder %s145, %s146
      %p160 = scmp.eq.s32.totalorder %s20, 2
      %p161 = por %p159, %p160
      %p163 = scmp.ne.s32.totalorder %s146, %s162
      %p164 = scmp.eq.s32.totalorder %s20, 0
      %p165 = por %p163, %p164
      %s166 = ssub.s32 %s21, %s33
      %s167 = ssub.s32 %s22, %s29
      %s168 = sor.u32 %s166, %s167
      %p169 = scmp.eq.s32.totalorder %s168, 0
      %s171 = sadd.s32 %s170, 1
      %s172 = scalar_select %p169, %s170, %s171
      %p175 = pneg %p169
      %p176 = scmp.eq.s32.totalorder %s14, 2
      %p177 = por %p175, %p176
      %p178 = scmp.ne.s32.totalorder %s170, %s173
      %p179 = scmp.eq.s32.totalorder %s14, 0
      %p180 = por %p178, %p179
      %p181 = scmp.ne.s32.totalorder %s170, %s173
      %p182 = scmp.eq.s32.totalorder %s19, 2
      %p183 = por %p181, %p182
      %p184 = scmp.ne.s32.totalorder %s173, %s174
      %p185 = scmp.eq.s32.totalorder %s19, 0
      %p186 = por %p184, %p185
      %p187 = scmp.ne.s32.totalorder %s173, %s174
      %p188 = scmp.eq.s32.totalorder %s20, 2
      %p189 = por %p187, %p188
      %p191 = scmp.ne.s32.totalorder %s174, %s190
      %p192 = scmp.eq.s32.totalorder %s20, 0
      %p193 = por %p191, %p192
      %p194 = scmp.le.s32.totalorder 1, %s14
      %p195 = scmp.lt.s32.totalorder %s14, 4
      %p196 = pnand %p194, %p195
      %p197 = pneg %p196
      // Predicated region
      $region9: #{spepy_block_forward.1} parent=5 // pred_check
        _
      $region10: #{spepy_block_forward.1} parent=5 // pred_check_branch
        %199 = sbr.rel (%p196) target = $region12
      $region11: #{spepy_block_forward.1} parent=5 // pred_region
        %s200 = ssub.s32 %s14, 1
      $region12: #{spepy_block_forward.1} parent=5 // pred_fallthru
        _
      %p201 = scmp.lt.s32.totalorder %s14, 3
      // Predicated region
      $region13: #{spepy_block_forward.1} parent=5 // pred_check
        %p202 = pneg %p201
      $region14: #{spepy_block_forward.1} parent=5 // pred_check_branch
        %204 = sbr.rel (%p202) target = $region16
      $region15: #{spepy_block_forward.1} parent=5 // pred_region
        // Predicated region
        $region17: #{spepy_block_forward.1} parent=15 // pred_check
          %p205 = pneg %p48
        $region18: #{spepy_block_forward.1} parent=15 // pred_check_branch
          %207 = sbr.rel (%p205) target = $region20
        $region19: #{spepy_block_forward.1} parent=15 // pred_region
          %s208 = smul.u32 2, %s22
          %p209 = scmp.lt.s32.totalorder %s21, 2
          %s210 = scalar_select %p209, %s21, 2
          %p211 = scmp.lt.s32.totalorder %s208, 1
          %s212 = scalar_select %p211, %s208, 1
          %s213 = smul.addr %s212, 2
          %s214 = smul.addr %s210, 4
          %s215 = sadd.s32 %s213, %s214
          %s216 = smul.addr %s215, 4
          %s217 = scalar_lea.vmem %s0, %s216
          %s218 = smul.u32 2, %s22
        $region20: #{spepy_block_forward.1} parent=15 // pred_fallthru
          _
        // Predicated region
        $region21: #{spepy_block_forward.1} parent=15 // pred_check
          %p219 = pneg %p74
        $region22: #{spepy_block_forward.1} parent=15 // pred_check_branch
          %221 = sbr.rel (%p219) target = $region24
        $region23: #{spepy_block_forward.1} parent=15 // pred_region
          %s222 = sand.u32 %s64, 1
          %s223 = scalar_lea.sflag [#allocation6], %s222
          %s224 = sand.u32 %s64, 1
          %s225 = smul.addr %s224, 384
          %s226 = scalar_lea.vmem [#allocation5], %s225
          %s228 = ssub.s32 6144, 6144
          %229 = vsyncadd %s223, %s228
          %s230 = smul.addr %s21, 96
          %s231 = smul.addr %s230, 64
          %s232 = scalar_lea.hbm %s1, %s231
          %s233 = sshll.u32 %s226, 4
          %s234 = int_to_ptr.vmem [resolvable:$true] %s233
          %239 = dma.hbm_to_vmem [thread:$0]  %s232, 6144, %s234, %s223, 128, 128, 8
        $region24: #{spepy_block_forward.1} parent=15 // pred_fallthru
          _
        // Predicated region
        $region25: #{spepy_block_forward.1} parent=15 // pred_check
          %p240 = pneg %p100
        $region26: #{spepy_block_forward.1} parent=15 // pred_check_branch
          %242 = sbr.rel (%p240) target = $region28
        $region27: #{spepy_block_forward.1} parent=15 // pred_region
          %p243 = scmp.lt.s32.totalorder %s21, 2
          %s244 = scalar_select %p243, %s21, 2
          %s245 = smul.addr %s244, 2
          %s246 = scalar_lea.vmem %s2, %s245
        $region28: #{spepy_block_forward.1} parent=15 // pred_fallthru
          _
        // Predicated region
        $region29: #{spepy_block_forward.1} parent=15 // pred_check
          %p247 = pneg %p126
        $region30: #{spepy_block_forward.1} parent=15 // pred_check_branch
          %249 = sbr.rel (%p247) target = $region32
        $region31: #{spepy_block_forward.1} parent=15 // pred_region
          %p250 = scmp.lt.s32.totalorder %s21, 2
          %s251 = scalar_select %p250, %s21, 2
          %s252 = smul.addr %s251, 192
          %s253 = smul.addr %s252, 4
          %s254 = scalar_lea.vmem %s3, %s253
        $region32: #{spepy_block_forward.1} parent=15 // pred_fallthru
          _
        // Predicated region
        $region33: #{spepy_block_forward.1} parent=15 // pred_check
          %p255 = pneg %p152
        $region34: #{spepy_block_forward.1} parent=15 // pred_check_branch
          %257 = sbr.rel (%p255) target = $region36
        $region35: #{spepy_block_forward.1} parent=15 // pred_region
          %p258 = scmp.lt.s32.totalorder %s21, 2
          %s259 = scalar_select %p258, %s21, 2
          %s260 = smul.addr %s259, 2
          %s261 = scalar_lea.vmem %s4, %s260
        $region36: #{spepy_block_forward.1} parent=15 // pred_fallthru
          _
      $region16: #{spepy_block_forward.1} parent=5 // pred_fallthru
        _
      %p262 = scmp.le.s32.totalorder 1, %s14
      %p263 = scmp.lt.s32.totalorder %s14, 4
      %p264 = pnand %p262, %p263
      %p265 = pneg %p264
      // Predicated region
      $region37: #{spepy_block_forward.1} parent=5 // pred_check
        _
      $region38: #{spepy_block_forward.1} parent=5 // pred_check_branch
        %267 = sbr.rel (%p264) target = $region40
      $region39: #{spepy_block_forward.1} parent=5 // pred_region
        %s268 = ssub.s32 %s14, 1
        %s269 = sand.u32 %s67, 1
        %s270 = scalar_lea.sflag [#allocation6], %s269
        %s271 = sand.u32 %s67, 1
        %s272 = smul.addr %s271, 384
        %s273 = scalar_lea.vmem [#allocation5], %s272
        // Predicated region
        $region41: #{spepy_block_forward.1} parent=39 // pred_check
          %p274 = pneg %p80
        $region42: #{spepy_block_forward.1} parent=39 // pred_check_branch
          %276 = sbr.rel (%p274) target = $region44
        $region43: #{spepy_block_forward.1} parent=39 // pred_region
          %277 = dma.done %s270, 6144
        $region44: #{spepy_block_forward.1} parent=39 // pred_fallthru
          _
        %s278 = smul.u32 2, %s24
        %p279 = scmp.lt.s32.totalorder %s23, 2
        %s280 = scalar_select %p279, %s23, 2
        %p281 = scmp.lt.s32.totalorder %s278, 1
        %s282 = scalar_select %p281, %s278, 1
        %s283 = smul.addr %s282, 2
        %s284 = smul.addr %s280, 4
        %s285 = sadd.s32 %s283, %s284
        %s286 = smul.addr %s285, 4
        %s287 = scalar_lea.vmem %s0, %s286
        %p288 = pneg %p54
        %p289 = pneg %p51
        %s290 = sand.u32 %s67, 1
        %s291 = scalar_lea.sflag [#allocation6], %s290
        %s292 = sand.u32 %s67, 1
        %s293 = smul.addr %s292, 384
        %s294 = scalar_lea.vmem [#allocation5], %s293
        %p295 = pneg %p80
        %p296 = pneg %p77
        %p297 = scmp.lt.s32.totalorder %s23, 2
        %s298 = scalar_select %p297, %s23, 2
        %s299 = smul.addr %s298, 2
        %s300 = scalar_lea.vmem %s2, %s299
        %p301 = pneg %p106
        %p302 = pneg %p103
        %p303 = scmp.lt.s32.totalorder %s23, 2
        %s304 = scalar_select %p303, %s23, 2
        %s305 = smul.addr %s304, 192
        %s306 = smul.addr %s305, 4
        %s307 = scalar_lea.vmem %s3, %s306
        %p308 = pneg %p132
        %p309 = pneg %p129
        %p310 = scmp.lt.s32.totalorder %s23, 2
        %s311 = scalar_select %p310, %s23, 2
        %s312 = smul.addr %s311, 2
        %s313 = scalar_lea.vmem %s4, %s312
        %p314 = pneg %p158
        %p315 = pneg %p155
        %p316 = pneg %p186
        %p317 = pneg %p183
        %s318 = smul.u32 2, %s24
        %p319 = scmp.lt.s32.totalorder %s23, 2
        %s320 = scalar_select %p319, %s23, 2
        %p321 = scmp.lt.s32.totalorder %s318, 1
        %s322 = scalar_select %p321, %s318, 1
        %s323 = smul.addr %s322, 4
        %s324 = smul.addr %s320, 8
        %s325 = sadd.s32 %s323, %s324
        %s326 = smul.addr %s325, 8
        %s327 = scalar_lea.vmem %s5, %s326
        %s328 = smul.u32 2, %s24
        %p329 = scmp.lt.s32.totalorder %s23, 2
        %s330 = scalar_select %p329, %s23, 2
        %p331 = scmp.lt.s32.totalorder %s328, 1
        %s332 = scalar_select %p331, %s328, 1
        %s333 = smul.addr %s332, 2
        %s334 = smul.addr %s330, 4
        %s335 = sadd.s32 %s333, %s334
        %s336 = smul.addr %s335, 4
        %s337 = scalar_lea.vmem %s0, %s336
        %s338 = smul.u32 2, %s24
        %p339 = scmp.lt.s32.totalorder %s23, 2
        %s340 = scalar_select %p339, %s23, 2
        %s341 = smul.addr %s340, 2
        %s342 = scalar_lea.vmem %s2, %s341
        %p343 = scmp.lt.s32.totalorder %s23, 2
        %s344 = scalar_select %p343, %s23, 2
        %s345 = smul.addr %s344, 192
        %s346 = smul.addr %s345, 4
        %s347 = scalar_lea.vmem %s3, %s346
        %p348 = scmp.lt.s32.totalorder %s23, 2
        %s349 = scalar_select %p348, %s23, 2
        %s350 = smul.addr %s349, 2
        %s351 = scalar_lea.vmem %s4, %s350
        %s352 = smul.u32 2, %s24
        %p353 = scmp.lt.s32.totalorder %s23, 2
        %s354 = scalar_select %p353, %s23, 2
        %p355 = scmp.lt.s32.totalorder %s352, 1
        %s356 = scalar_select %p355, %s352, 1
        %s357 = smul.addr %s356, 4
        %s358 = smul.addr %s354, 8
        %s359 = sadd.s32 %s357, %s358
        %s360 = smul.addr %s359, 8
        %s361 = scalar_lea.vmem %s5, %s360
        %s362 = smul.u32 2, %s24
        %364 = vst [vmem:[#allocation2] sm:$0xf] 0
        %365 = vst [vmem:[#allocation2 + $0x4] sm:$0xf] 0
        %366 = vst [vmem:[#allocation2 + $0x8] sm:$0xf] 0
        %367 = vst [vmem:[#allocation2 + $0xc] sm:$0xf] 0
        %vm368 = vcmask 1042432
        %vm369 = vsmask.f32 2304
        %vm370 = vmand %vm368, %vm369
        %v371 = vld [vmem:[#allocation2 + $0x10] sm:$0x7]
        %v372 = vsel %vm370, 0, %v371
        %373 = vst [vmem:[#allocation2 + $0x10] sm:$0x7] %v372
        %v374 = vld [vmem:[%s337] sm:$0xf]
        %v375 = vld [vmem:[%s337 + $0x4] sm:$0xf]
        %vm378 = vcmask 1040384
        %vm379 = vcmask 1044484
        %vm380 = vmor %vm378, %vm379
        %v381 = vrot.slane %v374, 7
        %v382 = vrot.slane %v381, 4
        %v383 = vrot.slane %v375, 7
        %v384 = vsel %vm380, %v382, %v383
        %v385 = vrot.slane %v383, 4
        %389 = vst [vmem:[#allocation2] sm:$0xe] %v381
        %390 = vst [vmem:[#allocation2 + $0x4] sm:$0xf] %v384
        %391 = vst [vmem:[#allocation2 + $0x8] sm:$0x1] %v385
        %s392 = scalar_lea.vmem %s337, 8
        %v393 = vld [vmem:[%s392] sm:$0xf]
        %v394 = vld [vmem:[%s392 + $0x4] sm:$0xf]
        %vm397 = vcmask 1041408
        %vm398 = vcmask 1045508
        %vm399 = vmor %vm397, %vm398
        %v400 = vrot.slane %v393, 6
        %v401 = vrot.slane %v400, 4
        %v402 = vrot.slane %v394, 6
        %v403 = vsel %vm399, %v401, %v402
        %v404 = vrot.slane %v402, 4
        %408 = vst [vmem:[#allocation2 + $0x8] sm:$0xc] %v400
        %409 = vst [vmem:[#allocation2 + $0xc] sm:$0xf] %v403
        %410 = vst [vmem:[#allocation2 + $0x10] sm:$0x3] %v404
        %v411 = vld [vmem:[%s342] sm:$0x3]
        %v413 = vlaneseq
        %v414 = vshrl.u32 %v413, 7
        %v415 = vsub.s32 0, %v414
        %v416 = vrot.slane %v411, %v415
        %v417 = vlaneseq
        %v418 = vshrl.u32 %v417, 7
        %v419 = vsub.s32 1, %v418
        %v420 = vrot.slane %v411, %v419
        %423 = vst [vmem:[#allocation4] sm:$0xff] %v416
        %424 = vst [vmem:[#allocation4 + $0x8] sm:$0xff] %v420
        %425 = vst [vmem:[#allocation4 + $0x10] sm:$0xff] %v416
        %426 = vst [vmem:[#allocation4 + $0x18] sm:$0xff] %v420
        %427 = vst [vmem:[#allocation4 + $0x20] sm:$0xff] %v416
        %428 = vst [vmem:[#allocation4 + $0x28] sm:$0xff] %v420
        %429 = vst [vmem:[#allocation4 + $0x30] sm:$0xff] %v416
        %430 = vst [vmem:[#allocation4 + $0x38] sm:$0xff] %v420
        %431 = vst [vmem:[#allocation4 + $0x40] sm:$0x7] %v416
        %432 = vst [vmem:[#allocation4 + $0x48] sm:$0x7] %v420
        %v433 = vld [vmem:[#allocation4] sm:$0xff]
        %v434 = vld [vmem:[#allocation4 + $0x8] sm:$0xff]
        %v435 = vld [vmem:[#allocation4 + $0x10] sm:$0xff]
        %v436 = vld [vmem:[#allocation4 + $0x18] sm:$0xff]
        %v437 = vld [vmem:[#allocation4 + $0x20] sm:$0xff]
        %v438 = vld [vmem:[#allocation4 + $0x28] sm:$0xff]
        %v439 = vld [vmem:[#allocation4 + $0x30] sm:$0xff]
        %v440 = vld [vmem:[#allocation4 + $0x38] sm:$0xff]
        %v441 = vld [vmem:[#allocation4 + $0x40] sm:$0x7]
        %v442 = vld [vmem:[#allocation4 + $0x48] sm:$0x7]
        %v443 = vld [vmem:[#allocation2] sm:$0xf]
        %v444 = vld [vmem:[#allocation2 + $0x4] sm:$0xf]
        %v445 = vld [vmem:[#allocation2 + $0x8] sm:$0xf]
        %v446 = vld [vmem:[#allocation2 + $0xc] sm:$0xf]
        %v447 = vld [vmem:[#allocation2 + $0x10] sm:$0x3]
        %v448 = vld [vmem:[%s273] sm:$0xff]
        %v449 = vld [vmem:[%s273 + $0x8] sm:$0xff]
        %v450 = vld [vmem:[%s273 + $0x10] sm:$0xff]
        %v451 = vld [vmem:[%s273 + $0x18] sm:$0xff]
        %v452 = vld [vmem:[%s273 + $0x20] sm:$0xff]
        %v453 = vld [vmem:[%s273 + $0x28] sm:$0xff]
        %v454 = vld [vmem:[%s273 + $0x30] sm:$0xff]
        %v455 = vld [vmem:[%s273 + $0x38] sm:$0xff]
        %v456 = vld [vmem:[%s273 + $0x40] sm:$0xff]
        %v457 = vld [vmem:[%s273 + $0x48] sm:$0xff]
        %v458 = vld [vmem:[%s273 + $0x50] sm:$0xff]
        %v459 = vld [vmem:[%s273 + $0x58] sm:$0xff]
        %v460 = vld [vmem:[%s273 + $0x60] sm:$0xff]
        %v461 = vld [vmem:[%s273 + $0x68] sm:$0xff]
        %v462 = vld [vmem:[%s273 + $0x70] sm:$0xff]
        %v463 = vld [vmem:[%s273 + $0x78] sm:$0xff]
        %v469 = vunpack.c.l.b16 %v443
        %v470 = vunpack.c.l.b16 %v444
        %v471 = vunpack.c.l.b16 %v445
        %v472 = vunpack.c.l.b16 %v446
        %v473 = vunpack.c.l.b16 %v447
        %v474 = vpack.c.b16 %v470, %v469
        %v475 = vpack.c.b16 %v472, %v471
        %v476 = vpack.c.b16 %v473, %v473
        %v496 = vunpack.c.l.b16 %v448
        %v497 = vunpack.c.h.b16 %v448
        %v498 = vunpack.c.l.b16 %v449
        %v499 = vunpack.c.h.b16 %v449
        %v500 = vunpack.c.l.b16 %v450
        %v501 = vunpack.c.h.b16 %v450
        %v502 = vunpack.c.l.b16 %v451
        %v503 = vunpack.c.h.b16 %v451
        %v504 = vunpack.c.l.b16 %v452
        %v505 = vunpack.c.h.b16 %v452
        %v506 = vunpack.c.l.b16 %v453
        %v507 = vunpack.c.h.b16 %v453
        %v508 = vunpack.c.l.b16 %v454
        %v509 = vunpack.c.h.b16 %v454
        %v510 = vunpack.c.l.b16 %v455
        %v511 = vunpack.c.h.b16 %v455
        %v512 = vunpack.c.l.b16 %v456
        %v513 = vunpack.c.h.b16 %v456
        %v514 = vunpack.c.l.b16 %v457
        %v515 = vunpack.c.h.b16 %v457
        %v516 = vunpack.c.l.b16 %v458
        %v517 = vunpack.c.h.b16 %v458
        %v518 = vunpack.c.l.b16 %v459
        %v519 = vunpack.c.h.b16 %v459
        %v520 = vunpack.c.l.b16 %v460
        %v521 = vunpack.c.h.b16 %v460
        %v522 = vunpack.c.l.b16 %v461
        %v523 = vunpack.c.h.b16 %v461
        %v524 = vunpack.c.l.b16 %v462
        %v525 = vunpack.c.h.b16 %v462
        %v526 = vunpack.c.l.b16 %v463
        %v527 = vunpack.c.h.b16 %v463
        %v528 = vpack.c.b16 %v498, %v496
        %v529 = vpack.c.b16 %v499, %v497
        %v530 = vpack.c.b16 %v502, %v500
        %v531 = vpack.c.b16 %v503, %v501
        %v532 = vpack.c.b16 %v506, %v504
        %v533 = vpack.c.b16 %v507, %v505
        %v534 = vpack.c.b16 %v510, %v508
        %v535 = vpack.c.b16 %v511, %v509
        %v536 = vpack.c.b16 %v514, %v512
        %v537 = vpack.c.b16 %v515, %v513
        %v538 = vpack.c.b16 %v518, %v516
        %v539 = vpack.c.b16 %v519, %v517
        %v540 = vpack.c.b16 %v522, %v520
        %v541 = vpack.c.b16 %v523, %v521
        %v542 = vpack.c.b16 %v526, %v524
        %v543 = vpack.c.b16 %v527, %v525
        %560 = vmatprep.subr.bf16.mxu0 %v529
        %561 = vmatpush1.bf16.msra.mxu0 %v528
        %562 = vmatprep.subr.bf16.mxu0 %v531
        %563 = vmatpush1.bf16.msra.mxu0 %v530
        %564 = vmatprep.subr.bf16.mxu0 %v533
        %565 = vmatpush1.bf16.msra.mxu0 %v532
        %566 = vmatprep.subr.bf16.mxu0 %v535
        %567 = vmatpush1.bf16.msra.mxu0 %v534
        %568 = vmatprep.subr.bf16.mxu0 %v537
        %569 = vmatpush1.bf16.msra.mxu0 %v536
        %570 = vmatprep.subr.bf16.mxu0 %v539
        %571 = vmatpush1.bf16.msra.mxu0 %v538
        %572 = vmatprep.subr.bf16.mxu0 %v541
        %573 = vmatpush1.bf16.msra.mxu0 %v540
        %574 = vmatprep.subr.bf16.mxu0 %v543
        %575 = vmatpush1.bf16.msra.mxu0 %v542
        %576 = vmatprep.subr.bf16.mxu0 0
        %577 = vmatpush1.bf16.msra.mxu0 0
        %578 = vmatprep.subr.bf16.mxu0 0
        %579 = vmatpush1.bf16.msra.mxu0 0
        %580 = vmatprep.subr.bf16.mxu0 0
        %581 = vmatpush1.bf16.msra.mxu0 0
        %582 = vmatprep.subr.bf16.mxu0 0
        %583 = vmatpush1.bf16.msra.mxu0 0
        %584 = vmatprep.subr.bf16.mxu0 0
        %585 = vmatpush1.bf16.msra.mxu0 0
        %586 = vmatprep.subr.bf16.mxu0 0
        %587 = vmatpush1.bf16.msra.mxu0 0
        %588 = vmatprep.subr.bf16.mxu0 0
        %589 = vmatpush1.bf16.msra.mxu0 0
        %590 = vmatprep.subr.bf16.mxu0 0
        %591 = vmatpush1.bf16.msra.mxu0 0
        %592 = vmatprep.mubr.bf16.mxu0 0
        %593 = vmatmul.mubr.bf16.gmra.mrb[0].mxu0 %v474
        %v594 = vpop.f32.mrb[0].mxu0
        %v595 = vadd.f32 0.0, %v594
        %v596 = vpop.f32.mrb[0].mxu0
        %v597 = vadd.f32 0.0, %v596
        %v598 = vpop.f32.mrb[0].mxu0
        %v599 = vadd.f32 0.0, %v598
        %v600 = vpop.f32.mrb[0].mxu0
        %v601 = vadd.f32 0.0, %v600
        %602 = vmatprep.mubr.bf16.mxu0 0
        %603 = vmatmul.mubr.bf16.gmra.mrb[0].mxu0 %v475
        %v604 = vpop.f32.mrb[0].mxu0
        %v605 = vadd.f32 0.0, %v604
        %v606 = vpop.f32.mrb[0].mxu0
        %v607 = vadd.f32 0.0, %v606
        %v608 = vpop.f32.mrb[0].mxu0
        %v609 = vadd.f32 0.0, %v608
        %v610 = vpop.f32.mrb[0].mxu0
        %v611 = vadd.f32 0.0, %v610
        %612 = vmatprep.mubr.bf16.mxu0 0
        %613 = vmatmul.mubr.bf16.gmra.mrb[0].mxu0 %v476
        %v614 = vpop.f32.mrb[0].mxu0
        %v615 = vadd.f32 0.0, %v614
        %v616 = vpop.f32.mrb[0].mxu0
        %v617 = vadd.f32 0.0, %v616
        %v618 = vpop.f32.mrb[0].mxu0
        %v619 = vpop.f32.mrb[0].mxu0
        %620 = vdwg.mxu0
        %v621 = vadd.f32 %v433, %v595
        %v622 = vadd.f32 %v434, %v597
        %v623 = vadd.f32 %v435, %v599
        %v624 = vadd.f32 %v436, %v601
        %v625 = vadd.f32 %v437, %v605
        %v626 = vadd.f32 %v438, %v607
        %v627 = vadd.f32 %v439, %v609
        %v628 = vadd.f32 %v440, %v611
        %v629 = vadd.f32 %v441, %v615
        %v630 = vadd.f32 %v442, %v617
        %631 = vst [vmem:[#allocation4] sm:$0xff] %v621
        %632 = vst [vmem:[#allocation4 + $0x8] sm:$0xff] %v622
        %633 = vst [vmem:[#allocation4 + $0x10] sm:$0xff] %v623
        %634 = vst [vmem:[#allocation4 + $0x18] sm:$0xff] %v624
        %635 = vst [vmem:[#allocation4 + $0x20] sm:$0xff] %v625
        %636 = vst [vmem:[#allocation4 + $0x28] sm:$0xff] %v626
        %637 = vst [vmem:[#allocation4 + $0x30] sm:$0xff] %v627
        %638 = vst [vmem:[#allocation4 + $0x38] sm:$0xff] %v628
        %639 = vst [vmem:[#allocation4 + $0x40] sm:$0x7] %v629
        %640 = vst [vmem:[#allocation4 + $0x48] sm:$0x7] %v630
        %v641 = vld [vmem:[#allocation4] sm:$0xff]
        %v642 = vld [vmem:[#allocation4 + $0x8] sm:$0xff]
        %v643 = vld [vmem:[#allocation4 + $0x10] sm:$0xff]
        %v644 = vld [vmem:[#allocation4 + $0x18] sm:$0xff]
        %v645 = vld [vmem:[#allocation4 + $0x20] sm:$0xff]
        %v646 = vld [vmem:[#allocation4 + $0x28] sm:$0xff]
        %v647 = vld [vmem:[#allocation4 + $0x30] sm:$0xff]
        %v648 = vld [vmem:[#allocation4 + $0x38] sm:$0xff]
        %v649 = vld [vmem:[#allocation4 + $0x40] sm:$0x7]
        %v650 = vld [vmem:[#allocation4 + $0x48] sm:$0x7]
        %v651 = vld [vmem:[#allocation2] sm:$0xf]
        %v652 = vld [vmem:[#allocation2 + $0x4] sm:$0xf]
        %v653 = vld [vmem:[#allocation2 + $0x8] sm:$0xf]
        %v654 = vld [vmem:[#allocation2 + $0xc] sm:$0xf]
        %v655 = vld [vmem:[#allocation2 + $0x10] sm:$0x3]
        %s656 = scalar_lea.vmem %s273, 128 [#allocation5]
        %v657 = vld [vmem:[%s656] sm:$0xff]
        %v658 = vld [vmem:[%s656 + $0x8] sm:$0xff]
        %v659 = vld [vmem:[%s656 + $0x10] sm:$0xff]
        %v660 = vld [vmem:[%s656 + $0x18] sm:$0xff]
        %v661 = vld [vmem:[%s656 + $0x20] sm:$0xff]
        %v662 = vld [vmem:[%s656 + $0x28] sm:$0xff]
        %v663 = vld [vmem:[%s656 + $0x30] sm:$0xff]
        %v664 = vld [vmem:[%s656 + $0x38] sm:$0xff]
        %v665 = vld [vmem:[%s656 + $0x40] sm:$0xff]
        %v666 = vld [vmem:[%s656 + $0x48] sm:$0xff]
        %v667 = vld [vmem:[%s656 + $0x50] sm:$0xff]
        %v668 = vld [vmem:[%s656 + $0x58] sm:$0xff]
        %v669 = vld [vmem:[%s656 + $0x60] sm:$0xff]
        %v670 = vld [vmem:[%s656 + $0x68] sm:$0xff]
        %v671 = vld [vmem:[%s656 + $0x70] sm:$0xff]
        %v672 = vld [vmem:[%s656 + $0x78] sm:$0xff]
        %v678 = vunpack.c.l.b16 %v651
        %v679 = vunpack.c.l.b16 %v652
        %v680 = vunpack.c.l.b16 %v653
        %v681 = vunpack.c.l.b16 %v654
        %v682 = vunpack.c.l.b16 %v655
        %v683 = vpack.c.b16 %v679, %v678
        %v684 = vpack.c.b16 %v681, %v680
        %v685 = vpack.c.b16 %v682, %v682
        %vm686 = vsmask.f32 7424
        %v688 = vshrl.u32 %v683, 16
        %v690 = vshll.u32 %v683, 16
        %v692 = vrot.slane %v690, 1
        %v693 = vor.u32 %v688, %v692
        %v695 = vshll.u32 %v684, 16
        %v697 = vrot.slane %v695, 1
        %v698 = vsel %vm686, %v693, %v697
        %v699 = vshrl.u32 %v684, 16
        %v701 = vor.u32 %v699, %v697
        %v703 = vshll.u32 %v685, 16
        %v705 = vrot.slane %v703, 1
        %v706 = vsel %vm686, %v701, %v705
        %v707 = vshrl.u32 %v685, 16
        %v709 = vor.u32 %v707, %v705
        %v729 = vunpack.c.l.b16 %v657
        %v730 = vunpack.c.h.b16 %v657
        %v731 = vunpack.c.l.b16 %v658
        %v732 = vunpack.c.h.b16 %v658
        %v733 = vunpack.c.l.b16 %v659
        %v734 = vunpack.c.h.b16 %v659
        %v735 = vunpack.c.l.b16 %v660
        %v736 = vunpack.c.h.b16 %v660
        %v737 = vunpack.c.l.b16 %v661
        %v738 = vunpack.c.h.b16 %v661
        %v739 = vunpack.c.l.b16 %v662
        %v740 = vunpack.c.h.b16 %v662
        %v741 = vunpack.c.l.b16 %v663
        %v742 = vunpack.c.h.b16 %v663
        %v743 = vunpack.c.l.b16 %v664
        %v744 = vunpack.c.h.b16 %v664
        %v745 = vunpack.c.l.b16 %v665
        %v746 = vunpack.c.h.b16 %v665
        %v747 = vunpack.c.l.b16 %v666
        %v748 = vunpack.c.h.b16 %v666
        %v749 = vunpack.c.l.b16 %v667
        %v750 = vunpack.c.h.b16 %v667
        %v751 = vunpack.c.l.b16 %v668
        %v752 = vunpack.c.h.b16 %v668
        %v753 = vunpack.c.l.b16 %v669
        %v754 = vunpack.c.h.b16 %v669
        %v755 = vunpack.c.l.b16 %v670
        %v756 = vunpack.c.h.b16 %v670
        %v757 = vunpack.c.l.b16 %v671
        %v758 = vunpack.c.h.b16 %v671
        %v759 = vunpack.c.l.b16 %v672
        %v760 = vunpack.c.h.b16 %v672
        %v761 = vpack.c.b16 %v731, %v729
        %v762 = vpack.c.b16 %v732, %v730
        %v763 = vpack.c.b16 %v735, %v733
        %v764 = vpack.c.b16 %v736, %v734
        %v765 = vpack.c.b16 %v739, %v737
        %v766 = vpack.c.b16 %v740, %v738
        %v767 = vpack.c.b16 %v743, %v741
        %v768 = vpack.c.b16 %v744, %v742
        %v769 = vpack.c.b16 %v747, %v745
        %v770 = vpack.c.b16 %v748, %v746
        %v771 = vpack.c.b16 %v751, %v749
        %v772 = vpack.c.b16 %v752, %v750
        %v773 = vpack.c.b16 %v755, %v753
        %v774 = vpack.c.b16 %v756, %v754
        %v775 = vpack.c.b16 %v759, %v757
        %v776 = vpack.c.b16 %v760, %v758
        %793 = vmatprep.subr.bf16.mxu0 %v762
        %794 = vmatpush1.bf16.msra.mxu0 %v761
        %795 = vmatprep.subr.bf16.mxu0 %v764
        %796 = vmatpush1.bf16.msra.mxu0 %v763
        %797 = vmatprep.subr.bf16.mxu0 %v766
        %798 = vmatpush1.bf16.msra.mxu0 %v765
        %799 = vmatprep.subr.bf16.mxu0 %v768
        %800 = vmatpush1.bf16.msra.mxu0 %v767
        %801 = vmatprep.subr.bf16.mxu0 %v770
        %802 = vmatpush1.bf16.msra.mxu0 %v769
        %803 = vmatprep.subr.bf16.mxu0 %v772
        %804 = vmatpush1.bf16.msra.mxu0 %v771
        %805 = vmatprep.subr.bf16.mxu0 %v774
        %806 = vmatpush1.bf16.msra.mxu0 %v773
        %807 = vmatprep.subr.bf16.mxu0 %v776
        %808 = vmatpush1.bf16.msra.mxu0 %v775
        %809 = vmatprep.subr.bf16.mxu0 0
        %810 = vmatpush1.bf16.msra.mxu0 0
        %811 = vmatprep.subr.bf16.mxu0 0
        %812 = vmatpush1.bf16.msra.mxu0 0
        %813 = vmatprep.subr.bf16.mxu0 0
        %814 = vmatpush1.bf16.msra.mxu0 0
        %815 = vmatprep.subr.bf16.mxu0 0
        %816 = vmatpush1.bf16.msra.mxu0 0
        %817 = vmatprep.subr.bf16.mxu0 0
        %818 = vmatpush1.bf16.msra.mxu0 0
        %819 = vmatprep.subr.bf16.mxu0 0
        %820 = vmatpush1.bf16.msra.mxu0 0
        %821 = vmatprep.subr.bf16.mxu0 0
        %822 = vmatpush1.bf16.msra.mxu0 0
        %823 = vmatprep.subr.bf16.mxu0 0
        %824 = vmatpush1.bf16.msra.mxu0 0
        %825 = vmatprep.mubr.bf16.mxu0 0
        %826 = vmatmul.mubr.bf16.gmra.mrb[0].mxu0 %v698
        %v827 = vpop.f32.mrb[0].mxu0
        %v828 = vadd.f32 0.0, %v827
        %v829 = vpop.f32.mrb[0].mxu0
        %v830 = vadd.f32 0.0, %v829
        %v831 = vpop.f32.mrb[0].mxu0
        %v832 = vadd.f32 0.0, %v831
        %v833 = vpop.f32.mrb[0].mxu0
        %v834 = vadd.f32 0.0, %v833
        %835 = vmatprep.mubr.bf16.mxu0 0
        %836 = vmatmul.mubr.bf16.gmra.mrb[0].mxu0 %v706
        %v837 = vpop.f32.mrb[0].mxu0
        %v838 = vadd.f32 0.0, %v837
        %v839 = vpop.f32.mrb[0].mxu0
        %v840 = vadd.f32 0.0, %v839
        %v841 = vpop.f32.mrb[0].mxu0
        %v842 = vadd.f32 0.0, %v841
        %v843 = vpop.f32.mrb[0].mxu0
        %v844 = vadd.f32 0.0, %v843
        %845 = vmatprep.mubr.bf16.mxu0 0
        %846 = vmatmul.mubr.bf16.gmra.mrb[0].mxu0 %v709
        %v847 = vpop.f32.mrb[0].mxu0
        %v848 = vadd.f32 0.0, %v847
        %v849 = vpop.f32.mrb[0].mxu0
        %v850 = vadd.f32 0.0, %v849
        %v851 = vpop.f32.mrb[0].mxu0
        %v852 = vpop.f32.mrb[0].mxu0
        %853 = vdwg.mxu0
        %v854 = vadd.f32 %v641, %v828
        %v855 = vadd.f32 %v642, %v830
        %v856 = vadd.f32 %v643, %v832
        %v857 = vadd.f32 %v644, %v834
        %v858 = vadd.f32 %v645, %v838
        %v859 = vadd.f32 %v646, %v840
        %v860 = vadd.f32 %v647, %v842
        %v861 = vadd.f32 %v648, %v844
        %v862 = vadd.f32 %v649, %v848
        %v863 = vadd.f32 %v650, %v850
        %864 = vst [vmem:[#allocation4] sm:$0xff] %v854
        %865 = vst [vmem:[#allocation4 + $0x8] sm:$0xff] %v855
        %866 = vst [vmem:[#allocation4 + $0x10] sm:$0xff] %v856
        %867 = vst [vmem:[#allocation4 + $0x18] sm:$0xff] %v857
        %868 = vst [vmem:[#allocation4 + $0x20] sm:$0xff] %v858
        %869 = vst [vmem:[#allocation4 + $0x28] sm:$0xff] %v859
        %870 = vst [vmem:[#allocation4 + $0x30] sm:$0xff] %v860
        %871 = vst [vmem:[#allocation4 + $0x38] sm:$0xff] %v861
        %872 = vst [vmem:[#allocation4 + $0x40] sm:$0x7] %v862
        %873 = vst [vmem:[#allocation4 + $0x48] sm:$0x7] %v863
        %v874 = vld [vmem:[#allocation4] sm:$0xff]
        %v875 = vld [vmem:[#allocation4 + $0x8] sm:$0xff]
        %v876 = vld [vmem:[#allocation4 + $0x10] sm:$0xff]
        %v877 = vld [vmem:[#allocation4 + $0x18] sm:$0xff]
        %v878 = vld [vmem:[#allocation4 + $0x20] sm:$0xff]
        %v879 = vld [vmem:[#allocation4 + $0x28] sm:$0xff]
        %v880 = vld [vmem:[#allocation4 + $0x30] sm:$0xff]
        %v881 = vld [vmem:[#allocation4 + $0x38] sm:$0xff]
        %v882 = vld [vmem:[#allocation4 + $0x40] sm:$0x7]
        %v883 = vld [vmem:[#allocation4 + $0x48] sm:$0x7]
        %v884 = vld [vmem:[#allocation2] sm:$0xe]
        %v885 = vld [vmem:[#allocation2 + $0x4] sm:$0xf]
        %v886 = vld [vmem:[#allocation2 + $0x8] sm:$0xf]
        %v887 = vld [vmem:[#allocation2 + $0xc] sm:$0xf]
        %v888 = vld [vmem:[#allocation2 + $0x10] sm:$0x7]
        %s889 = scalar_lea.vmem %s273, 256 [#allocation5]
        %v890 = vld [vmem:[%s889] sm:$0xff]
        %v891 = vld [vmem:[%s889 + $0x8] sm:$0xff]
        %v892 = vld [vmem:[%s889 + $0x10] sm:$0xff]
        %v893 = vld [vmem:[%s889 + $0x18] sm:$0xff]
        %v894 = vld [vmem:[%s889 + $0x20] sm:$0xff]
        %v895 = vld [vmem:[%s889 + $0x28] sm:$0xff]
        %v896 = vld [vmem:[%s889 + $0x30] sm:$0xff]
        %v897 = vld [vmem:[%s889 + $0x38] sm:$0xff]
        %v898 = vld [vmem:[%s889 + $0x40] sm:$0xff]
        %v899 = vld [vmem:[%s889 + $0x48] sm:$0xff]
        %v900 = vld [vmem:[%s889 + $0x50] sm:$0xff]
        %v901 = vld [vmem:[%s889 + $0x58] sm:$0xff]
        %v902 = vld [vmem:[%s889 + $0x60] sm:$0xff]
        %v903 = vld [vmem:[%s889 + $0x68] sm:$0xff]
        %v904 = vld [vmem:[%s889 + $0x70] sm:$0xff]
        %v905 = vld [vmem:[%s889 + $0x78] sm:$0xff]
        %v911 = vunpack.c.l.b16 %v884
        %v912 = vunpack.c.l.b16 %v885
        %v913 = vunpack.c.l.b16 %v886
        %v914 = vunpack.c.l.b16 %v887
        %v915 = vunpack.c.l.b16 %v888
        %v916 = vpack.c.b16 %v912, %v911
        %v917 = vpack.c.b16 %v914, %v913
        %v918 = vpack.c.b16 %v915, %v915
        %vm919 = vcmask 1046528
        %v920 = vrot.slane %v916, 1
        %v921 = vrot.slane %v917, 1
        %v922 = vsel %vm919, %v920, %v921
        %v923 = vrot.slane %v918, 1
        %v924 = vsel %vm919, %v921, %v923
        %v944 = vunpack.c.l.b16 %v890
        %v945 = vunpack.c.h.b16 %v890
        %v946 = vunpack.c.l.b16 %v891
        %v947 = vunpack.c.h.b16 %v891
        %v948 = vunpack.c.l.b16 %v892
        %v949 = vunpack.c.h.b16 %v892
        %v950 = vunpack.c.l.b16 %v893
        %v951 = vunpack.c.h.b16 %v893
        %v952 = vunpack.c.l.b16 %v894
        %v953 = vunpack.c.h.b16 %v894
        %v954 = vunpack.c.l.b16 %v895
        %v955 = vunpack.c.h.b16 %v895
        %v956 = vunpack.c.l.b16 %v896
        %v957 = vunpack.c.h.b16 %v896
        %v958 = vunpack.c.l.b16 %v897
        %v959 = vunpack.c.h.b16 %v897
        %v960 = vunpack.c.l.b16 %v898
        %v961 = vunpack.c.h.b16 %v898
        %v962 = vunpack.c.l.b16 %v899
        %v963 = vunpack.c.h.b16 %v899
        %v964 = vunpack.c.l.b16 %v900
        %v965 = vunpack.c.h.b16 %v900
        %v966 = vunpack.c.l.b16 %v901
        %v967 = vunpack.c.h.b16 %v901
        %v968 = vunpack.c.l.b16 %v902
        %v969 = vunpack.c.h.b16 %v902
        %v970 = vunpack.c.l.b16 %v903
        %v971 = vunpack.c.h.b16 %v903
        %v972 = vunpack.c.l.b16 %v904
        %v973 = vunpack.c.h.b16 %v904
        %v974 = vunpack.c.l.b16 %v905
        %v975 = vunpack.c.h.b16 %v905
        %v976 = vpack.c.b16 %v946, %v944
        %v977 = vpack.c.b16 %v947, %v945
        %v978 = vpack.c.b16 %v950, %v948
        %v979 = vpack.c.b16 %v951, %v949
        %v980 = vpack.c.b16 %v954, %v952
        %v981 = vpack.c.b16 %v955, %v953
        %v982 = vpack.c.b16 %v958, %v956
        %v983 = vpack.c.b16 %v959, %v957
        %v984 = vpack.c.b16 %v962, %v960
        %v985 = vpack.c.b16 %v963, %v961
        %v986 = vpack.c.b16 %v966, %v964
        %v987 = vpack.c.b16 %v967, %v965
        %v988 = vpack.c.b16 %v970, %v968
        %v989 = vpack.c.b16 %v971, %v969
        %v990 = vpack.c.b16 %v974, %v972
        %v991 = vpack.c.b16 %v975, %v973
        %1008 = vmatprep.subr.bf16.mxu0 %v977
        %1009 = vmatpush1.bf16.msra.mxu0 %v976
        %1010 = vmatprep.subr.bf16.mxu0 %v979
        %1011 = vmatpush1.bf16.msra.mxu0 %v978
        %1012 = vmatprep.subr.bf16.mxu0 %v981
        %1013 = vmatpush1.bf16.msra.mxu0 %v980
        %1014 = vmatprep.subr.bf16.mxu0 %v983
        %1015 = vmatpush1.bf16.msra.mxu0 %v982
        %1016 = vmatprep.subr.bf16.mxu0 %v985
        %1017 = vmatpush1.bf16.msra.mxu0 %v984
        %1018 = vmatprep.subr.bf16.mxu0 %v987
        %1019 = vmatpush1.bf16.msra.mxu0 %v986
        %1020 = vmatprep.subr.bf16.mxu0 %v989
        %1021 = vmatpush1.bf16.msra.mxu0 %v988
        %1022 = vmatprep.subr.bf16.mxu0 %v991
        %1023 = vmatpush1.bf16.msra.mxu0 %v990
        %1024 = vmatprep.subr.bf16.mxu0 0
        %1025 = vmatpush1.bf16.msra.mxu0 0
        %1026 = vmatprep.subr.bf16.mxu0 0
        %1027 = vmatpush1.bf16.msra.mxu0 0
        %1028 = vmatprep.subr.bf16.mxu0 0
        %1029 = vmatpush1.bf16.msra.mxu0 0
        %1030 = vmatprep.subr.bf16.mxu0 0
        %1031 = vmatpush1.bf16.msra.mxu0 0
        %1032 = vmatprep.subr.bf16.mxu0 0
        %1033 = vmatpush1.bf16.msra.mxu0 0
        %1034 = vmatprep.subr.bf16.mxu0 0
        %1035 = vmatpush1.bf16.msra.mxu0 0
        %1036 = vmatprep.subr.bf16.mxu0 0
        %1037 = vmatpush1.bf16.msra.mxu0 0
        %1038 = vmatprep.subr.bf16.mxu0 0
        %1039 = vmatpush1.bf16.msra.mxu0 0
        %1040 = vmatprep.mubr.bf16.mxu0 0
        %1041 = vmatmul.mubr.bf16.gmra.mrb[0].mxu0 %v922
        %v1042 = vpop.f32.mrb[0].mxu0
        %v1043 = vadd.f32 0.0, %v1042
        %v1044 = vpop.f32.mrb[0].mxu0
        %v1045 = vadd.f32 0.0, %v1044
        %v1046 = vpop.f32.mrb[0].mxu0
        %v1047 = vadd.f32 0.0, %v1046
        %v1048 = vpop.f32.mrb[0].mxu0
        %v1049 = vadd.f32 0.0, %v1048
        %1050 = vmatprep.mubr.bf16.mxu0 0
        %1051 = vmatmul.mubr.bf16.gmra.mrb[0].mxu0 %v924
        %v1052 = vpop.f32.mrb[0].mxu0
        %v1053 = vadd.f32 0.0, %v1052
        %v1054 = vpop.f32.mrb[0].mxu0
        %v1055 = vadd.f32 0.0, %v1054
        %v1056 = vpop.f32.mrb[0].mxu0
        %v1057 = vadd.f32 0.0, %v1056
        %v1058 = vpop.f32.mrb[0].mxu0
        %v1059 = vadd.f32 0.0, %v1058
        %1060 = vmatprep.mubr.bf16.mxu0 0
        %1061 = vmatmul.mubr.bf16.gmra.mrb[0].mxu0 %v923
        %v1062 = vpop.f32.mrb[0].mxu0
        %v1063 = vadd.f32 0.0, %v1062
        %v1064 = vpop.f32.mrb[0].mxu0
        %v1065 = vadd.f32 0.0, %v1064
        %v1066 = vpop.f32.mrb[0].mxu0
        %v1067 = vpop.f32.mrb[0].mxu0
        %1068 = vdwg.mxu0
        %v1069 = vadd.f32 %v874, %v1043
        %v1070 = vadd.f32 %v875, %v1045
        %v1071 = vadd.f32 %v876, %v1047
        %v1072 = vadd.f32 %v877, %v1049
        %v1073 = vadd.f32 %v878, %v1053
        %v1074 = vadd.f32 %v879, %v1055
        %v1075 = vadd.f32 %v880, %v1057
        %v1076 = vadd.f32 %v881, %v1059
        %v1077 = vadd.f32 %v882, %v1063
        %v1078 = vadd.f32 %v883, %v1065
        %1079 = vst [vmem:[#allocation4] sm:$0xff] %v1069
        %1080 = vst [vmem:[#allocation4 + $0x8] sm:$0xff] %v1070
        %1081 = vst [vmem:[#allocation4 + $0x10] sm:$0xff] %v1071
        %1082 = vst [vmem:[#allocation4 + $0x18] sm:$0xff] %v1072
        %1083 = vst [vmem:[#allocation4 + $0x20] sm:$0xff] %v1073
        %1084 = vst [vmem:[#allocation4 + $0x28] sm:$0xff] %v1074
        %1085 = vst [vmem:[#allocation4 + $0x30] sm:$0xff] %v1075
        %1086 = vst [vmem:[#allocation4 + $0x38] sm:$0xff] %v1076
        %1087 = vst [vmem:[#allocation4 + $0x40] sm:$0x7] %v1077
        %1088 = vst [vmem:[#allocation4 + $0x48] sm:$0x7] %v1078
        %1089 = vst [vmem:[#allocation3] sm:$0xff] 0
        %1090 = vst [vmem:[#allocation3 + $0x8] sm:$0xff] 0
        %1091 = vst [vmem:[#allocation3 + $0x10] sm:$0xff] 0
        %1092 = vst [vmem:[#allocation3 + $0x18] sm:$0xff] 0
        %vm1093 = vcmask 1046532
        %vm1094 = vsmask.f32 6400
        %vm1095 = vmand %vm1093, %vm1094
        %vm1096 = vmor %vm1095, %vm370
        %v1097 = vld [vmem:[#allocation3 + $0x20] sm:$0x77]
        %v1098 = vsel %vm1096, 0, %v1097
        %1099 = vst [vmem:[#allocation3 + $0x20] sm:$0x77] %v1098
        %v1100 = vld [vmem:[#allocation4] sm:$0xfe]
        %v1101 = vld [vmem:[#allocation4 + $0x8] sm:$0xfe]
        %v1102 = vld [vmem:[#allocation4 + $0x10] sm:$0xff]
        %v1103 = vld [vmem:[#allocation4 + $0x18] sm:$0xff]
        %v1104 = vld [vmem:[#allocation4 + $0x20] sm:$0x1]
        %v1105 = vld [vmem:[#allocation4 + $0x28] sm:$0x1]
        %v1106 = vmul.f32 %v1100, 0.2
        %v1107 = vmul.f32 %v1101, 0.2
        %v1108 = vmul.f32 %v1102, 0.2
        %v1109 = vmul.f32 %v1103, 0.2
        %v1110 = vmul.f32 %v1104, 0.2
        %v1111 = vmul.f32 %v1105, 0.2
        %v1112 = vmax.f32 %v1100, %v1106
        %v1113 = vmax.f32 %v1101, %v1107
        %v1114 = vmax.f32 %v1102, %v1108
        %v1115 = vmax.f32 %v1103, %v1109
        %v1116 = vmax.f32 %v1104, %v1110
        %v1117 = vmax.f32 %v1105, %v1111
        %v1118 = vpack.c.bf16 %v1114, %v1112
        %v1119 = vpack.c.bf16 %v1115, %v1113
        %v1120 = vpack.c.bf16 %v1116, %v1116
        %v1121 = vpack.c.bf16 %v1117, %v1117
        %v1126 = vunpack.c.l.b16 %v1118
        %v1127 = vunpack.c.l.b16 %v1119
        %v1128 = vunpack.c.h.b16 %v1118
        %v1129 = vunpack.c.h.b16 %v1119
        %v1130 = vunpack.c.l.b16 %v1120
        %v1131 = vunpack.c.l.b16 %v1121
        %v1132 = vpack.c.b16 %v1127, %v1126
        %v1133 = vpack.c.b16 %v1129, %v1128
        %v1134 = vpack.c.b16 %v1131, %v1130
        %vm1135 = vsmask.f32 256
        %vm1136 = vsmask.f32 4368
        %vm1137 = vmor %vm1135, %vm1136
        %v1139 = vshrl.u32 %v1132, 16
        %v1141 = vrot.slane %v1139, 7
        %v1142 = vshll.u32 %v1132, 16
        %v1144 = vor.u32 %v1141, %v1142
        %v1145 = vrot.slane %v1141, 4
        %v1147 = vshrl.u32 %v1133, 16
        %v1149 = vrot.slane %v1147, 7
        %v1150 = vshll.u32 %v1133, 16
        %v1152 = vor.u32 %v1149, %v1150
        %v1153 = vsel %vm1137, %v1145, %v1152
        %v1154 = vrot.slane %v1149, 4
        %v1156 = vshll.u32 %v1134, 16
        %v1158 = vsel %vm1137, %v1154, %v1156
        %1162 = vst [vmem:[#allocation3] sm:$0xee] %v1144
        %1163 = vst [vmem:[#allocation3 + $0x8] sm:$0xff] %v1153
        %1164 = vst [vmem:[#allocation3 + $0x10] sm:$0x11] %v1158
        %v1165 = vld [vmem:[#allocation4 + $0x20] sm:$0xf8]
        %v1166 = vld [vmem:[#allocation4 + $0x28] sm:$0xf8]
        %v1167 = vld [vmem:[#allocation4 + $0x30] sm:$0xff]
        %v1168 = vld [vmem:[#allocation4 + $0x38] sm:$0xff]
        %v1169 = vld [vmem:[#allocation4 + $0x40] sm:$0x7]
        %v1170 = vld [vmem:[#allocation4 + $0x48] sm:$0x7]
        %v1171 = vmul.f32 %v1165, 0.2
        %v1172 = vmul.f32 %v1166, 0.2
        %v1173 = vmul.f32 %v1167, 0.2
        %v1174 = vmul.f32 %v1168, 0.2
        %v1175 = vmul.f32 %v1169, 0.2
        %v1176 = vmul.f32 %v1170, 0.2
        %v1177 = vmax.f32 %v1165, %v1171
        %v1178 = vmax.f32 %v1166, %v1172
        %v1179 = vmax.f32 %v1167, %v1173
        %v1180 = vmax.f32 %v1168, %v1174
        %v1181 = vmax.f32 %v1169, %v1175
        %v1182 = vmax.f32 %v1170, %v1176
        %v1183 = vpack.c.bf16 %v1179, %v1177
        %v1184 = vpack.c.bf16 %v1180, %v1178
        %v1185 = vpack.c.bf16 %v1181, %v1181
        %v1186 = vpack.c.bf16 %v1182, %v1182
        %v1191 = vunpack.c.l.b16 %v1183
        %v1192 = vunpack.c.l.b16 %v1184
        %v1193 = vunpack.c.h.b16 %v1183
        %v1194 = vunpack.c.h.b16 %v1184
        %v1195 = vunpack.c.l.b16 %v1185
        %v1196 = vunpack.c.l.b16 %v1186
        %v1197 = vpack.c.b16 %v1192, %v1191
        %v1198 = vpack.c.b16 %v1194, %v1193
        %v1199 = vpack.c.b16 %v1196, %v1195
        %v1201 = vshrl.u32 %v1197, 16
        %v1203 = vrot.slane %v1201, 7
        %v1204 = vshll.u32 %v1197, 16
        %v1206 = vor.u32 %v1203, %v1204
        %v1207 = vrot.slane %v1203, 4
        %v1209 = vshrl.u32 %v1198, 16
        %v1211 = vrot.slane %v1209, 7
        %v1212 = vshll.u32 %v1198, 16
        %v1214 = vor.u32 %v1211, %v1212
        %v1215 = vsel %vm1137, %v1207, %v1214
        %v1216 = vrot.slane %v1211, 4
        %v1218 = vshrl.u32 %v1199, 16
        %v1220 = vrot.slane %v1218, 7
        %v1221 = vshll.u32 %v1199, 16
        %v1223 = vor.u32 %v1220, %v1221
        %v1224 = vsel %vm1137, %v1216, %v1223
        %1228 = vst [vmem:[#allocation3 + $0x10] sm:$0xcc] %v1206
        %1229 = vst [vmem:[#allocation3 + $0x18] sm:$0xff] %v1215
        %1230 = vst [vmem:[#allocation3 + $0x20] sm:$0x33] %v1224
        %v1231 = vld [vmem:[%s351] sm:$0x3]
        %v1233 = vlaneseq
        %v1234 = vshrl.u32 %v1233, 7
        %v1235 = vsub.s32 0, %v1234
        %v1236 = vrot.slane %v1231, %v1235
        %v1237 = vlaneseq
        %v1238 = vshrl.u32 %v1237, 7
        %v1239 = vsub.s32 1, %v1238
        %v1240 = vrot.slane %v1231, %v1239
        %1243 = vst [vmem:[#allocation4] sm:$0xff] %v1236
        %1244 = vst [vmem:[#allocation4 + $0x8] sm:$0xff] %v1240
        %1245 = vst [vmem:[#allocation4 + $0x10] sm:$0xff] %v1236
        %1246 = vst [vmem:[#allocation4 + $0x18] sm:$0xff] %v1240
        %1247 = vst [vmem:[#allocation4 + $0x20] sm:$0xff] %v1236
        %1248 = vst [vmem:[#allocation4 + $0x28] sm:$0xff] %v1240
        %1249 = vst [vmem:[#allocation4 + $0x30] sm:$0xff] %v1236
        %1250 = vst [vmem:[#allocation4 + $0x38] sm:$0xff] %v1240
        %1251 = vst [vmem:[#allocation4 + $0x40] sm:$0x7] %v1236
        %1252 = vst [vmem:[#allocation4 + $0x48] sm:$0x7] %v1240
        %v1253 = vld [vmem:[#allocation4] sm:$0xff]
        %v1254 = vld [vmem:[#allocation4 + $0x8] sm:$0xff]
        %v1255 = vld [vmem:[#allocation4 + $0x10] sm:$0xff]
        %v1256 = vld [vmem:[#allocation4 + $0x18] sm:$0xff]
        %v1257 = vld [vmem:[#allocation4 + $0x20] sm:$0xff]
        %v1258 = vld [vmem:[#allocation4 + $0x28] sm:$0xff]
        %v1259 = vld [vmem:[#allocation4 + $0x30] sm:$0xff]
        %v1260 = vld [vmem:[#allocation4 + $0x38] sm:$0xff]
        %v1261 = vld [vmem:[#allocation4 + $0x40] sm:$0x7]
        %v1262 = vld [vmem:[#allocation4 + $0x48] sm:$0x7]
        %v1263 = vld [vmem:[#allocation3] sm:$0xff]
        %v1264 = vld [vmem:[#allocation3 + $0x8] sm:$0xff]
        %v1265 = vld [vmem:[#allocation3 + $0x10] sm:$0xff]
        %v1266 = vld [vmem:[#allocation3 + $0x18] sm:$0xff]
        %v1267 = vld [vmem:[#allocation3 + $0x20] sm:$0x33]
        %v1268 = vld [vmem:[%s347] sm:$0xff]
        %v1269 = vld [vmem:[%s347 + $0x8] sm:$0xff]
        %v1270 = vld [vmem:[%s347 + $0x10] sm:$0xff]
        %v1271 = vld [vmem:[%s347 + $0x18] sm:$0xff]
        %v1272 = vld [vmem:[%s347 + $0x20] sm:$0xff]
        %v1273 = vld [vmem:[%s347 + $0x28] sm:$0xff]
        %v1274 = vld [vmem:[%s347 + $0x30] sm:$0xff]
        %v1275 = vld [vmem:[%s347 + $0x38] sm:$0xff]
        %v1276 = vld [vmem:[%s347 + $0x40] sm:$0xff]
        %v1277 = vld [vmem:[%s347 + $0x48] sm:$0xff]
        %v1278 = vld [vmem:[%s347 + $0x50] sm:$0xff]
        %v1279 = vld [vmem:[%s347 + $0x58] sm:$0xff]
        %v1280 = vld [vmem:[%s347 + $0x60] sm:$0xff]
        %v1281 = vld [vmem:[%s347 + $0x68] sm:$0xff]
        %v1282 = vld [vmem:[%s347 + $0x70] sm:$0xff]
        %v1283 = vld [vmem:[%s347 + $0x78] sm:$0xff]
        %v1284 = vld [vmem:[%s347 + $0x80] sm:$0xff]
        %v1285 = vld [vmem:[%s347 + $0x88] sm:$0xff]
        %v1286 = vld [vmem:[%s347 + $0x90] sm:$0xff]
        %v1287 = vld [vmem:[%s347 + $0x98] sm:$0xff]
        %v1288 = vld [vmem:[%s347 + $0xa0] sm:$0xff]
        %v1289 = vld [vmem:[%s347 + $0xa8] sm:$0xff]
        %v1290 = vld [vmem:[%s347 + $0xb0] sm:$0xff]
        %v1291 = vld [vmem:[%s347 + $0xb8] sm:$0xff]
        %v1292 = vld [vmem:[%s347 + $0xc0] sm:$0xff]
        %v1293 = vld [vmem:[%s347 + $0xc8] sm:$0xff]
        %v1294 = vld [vmem:[%s347 + $0xd0] sm:$0xff]
        %v1295 = vld [vmem:[%s347 + $0xd8] sm:$0xff]
        %v1296 = vld [vmem:[%s347 + $0xe0] sm:$0xff]
        %v1297 = vld [vmem:[%s347 + $0xe8] sm:$0xff]
        %v1298 = vld [vmem:[%s347 + $0xf0] sm:$0xff]
        %v1299 = vld [vmem:[%s347 + $0xf8] sm:$0xff]
        %v1305 = vunpack.c.l.b16 %v1263
        %v1306 = vunpack.c.h.b16 %v1263
        %v1307 = vunpack.c.l.b16 %v1264
        %v1308 = vunpack.c.h.b16 %v1264
        %v1309 = vunpack.c.l.b16 %v1265
        %v1310 = vunpack.c.h.b16 %v1265
        %v1311 = vunpack.c.l.b16 %v1266
        %v1312 = vunpack.c.h.b16 %v1266
        %v1313 = vunpack.c.l.b16 %v1267
        %v1314 = vunpack.c.h.b16 %v1267
        %v1315 = vpack.c.b16 %v1307, %v1305
        %v1316 = vpack.c.b16 %v1308, %v1306
        %v1317 = vpack.c.b16 %v1311, %v1309
        %v1318 = vpack.c.b16 %v1312, %v1310
        %v1319 = vpack.c.b16 %v1313, %v1313
        %v1320 = vpack.c.b16 %v1314, %v1314
        %v1359 = vunpack.c.l.b16 %v1268
        %v1360 = vunpack.c.h.b16 %v1268
        %v1361 = vunpack.c.l.b16 %v1269
        %v1362 = vunpack.c.h.b16 %v1269
        %v1363 = vunpack.c.l.b16 %v1270
        %v1364 = vunpack.c.h.b16 %v1270
        %v1365 = vunpack.c.l.b16 %v1271
        %v1366 = vunpack.c.h.b16 %v1271
        %v1367 = vunpack.c.l.b16 %v1272
        %v1368 = vunpack.c.h.b16 %v1272
        %v1369 = vunpack.c.l.b16 %v1273
        %v1370 = vunpack.c.h.b16 %v1273
        %v1371 = vunpack.c.l.b16 %v1274
        %v1372 = vunpack.c.h.b16 %v1274
        %v1373 = vunpack.c.l.b16 %v1275
        %v1374 = vunpack.c.h.b16 %v1275
        %v1375 = vunpack.c.l.b16 %v1276
        %v1376 = vunpack.c.h.b16 %v1276
        %v1377 = vunpack.c.l.b16 %v1277
        %v1378 = vunpack.c.h.b16 %v1277
        %v1379 = vunpack.c.l.b16 %v1278
        %v1380 = vunpack.c.h.b16 %v1278
        %v1381 = vunpack.c.l.b16 %v1279
        %v1382 = vunpack.c.h.b16 %v1279
        %v1383 = vunpack.c.l.b16 %v1280
        %v1384 = vunpack.c.h.b16 %v1280
        %v1385 = vunpack.c.l.b16 %v1281
        %v1386 = vunpack.c.h.b16 %v1281
        %v1387 = vunpack.c.l.b16 %v1282
        %v1388 = vunpack.c.h.b16 %v1282
        %v1389 = vunpack.c.l.b16 %v1283
        %v1390 = vunpack.c.h.b16 %v1283
        %v1391 = vunpack.c.l.b16 %v1284
        %v1392 = vunpack.c.h.b16 %v1284
        %v1393 = vunpack.c.l.b16 %v1285
        %v1394 = vunpack.c.h.b16 %v1285
        %v1395 = vunpack.c.l.b16 %v1286
        %v1396 = vunpack.c.h.b16 %v1286
        %v1397 = vunpack.c.l.b16 %v1287
        %v1398 = vunpack.c.h.b16 %v1287
        %v1399 = vunpack.c.l.b16 %v1288
        %v1400 = vunpack.c.h.b16 %v1288
        %v1401 = vunpack.c.l.b16 %v1289
        %v1402 = vunpack.c.h.b16 %v1289
        %v1403 = vunpack.c.l.b16 %v1290
        %v1404 = vunpack.c.h.b16 %v1290
        %v1405 = vunpack.c.l.b16 %v1291
        %v1406 = vunpack.c.h.b16 %v1291
        %v1407 = vunpack.c.l.b16 %v1292
        %v1408 = vunpack.c.h.b16 %v1292
        %v1409 = vunpack.c.l.b16 %v1293
        %v1410 = vunpack.c.h.b16 %v1293
        %v1411 = vunpack.c.l.b16 %v1294
        %v1412 = vunpack.c.h.b16 %v1294
        %v1413 = vunpack.c.l.b16 %v1295
        %v1414 = vunpack.c.h.b16 %v1295
        %v1415 = vunpack.c.l.b16 %v1296
        %v1416 = vunpack.c.h.b16 %v1296
        %v1417 = vunpack.c.l.b16 %v1297
        %v1418 = vunpack.c.h.b16 %v1297
        %v1419 = vunpack.c.l.b16 %v1298
        %v1420 = vunpack.c.h.b16 %v1298
        %v1421 = vunpack.c.l.b16 %v1299
        %v1422 = vunpack.c.h.b16 %v1299
        %v1423 = vpack.c.b16 %v1361, %v1359
        %v1424 = vpack.c.b16 %v1362, %v1360
        %v1425 = vpack.c.b16 %v1365, %v1363
        %v1426 = vpack.c.b16 %v1366, %v1364
        %v1427 = vpack.c.b16 %v1369, %v1367
        %v1428 = vpack.c.b16 %v1370, %v1368
        %v1429 = vpack.c.b16 %v1373, %v1371
        %v1430 = vpack.c.b16 %v1374, %v1372
        %v1431 = vpack.c.b16 %v1377, %v1375
        %v1432 = vpack.c.b16 %v1378, %v1376
        %v1433 = vpack.c.b16 %v1381, %v1379
        %v1434 = vpack.c.b16 %v1382, %v1380
        %v1435 = vpack.c.b16 %v1385, %v1383
        %v1436 = vpack.c.b16 %v1386, %v1384
        %v1437 = vpack.c.b16 %v1389, %v1387
        %v1438 = vpack.c.b16 %v1390, %v1388
        %v1439 = vpack.c.b16 %v1393, %v1391
        %v1440 = vpack.c.b16 %v1394, %v1392
        %v1441 = vpack.c.b16 %v1397, %v1395
        %v1442 = vpack.c.b16 %v1398, %v1396
        %v1443 = vpack.c.b16 %v1401, %v1399
        %v1444 = vpack.c.b16 %v1402, %v1400
        %v1445 = vpack.c.b16 %v1405, %v1403
        %v1446 = vpack.c.b16 %v1406, %v1404
        %v1447 = vpack.c.b16 %v1409, %v1407
        %v1448 = vpack.c.b16 %v1410, %v1408
        %v1449 = vpack.c.b16 %v1413, %v1411
        %v1450 = vpack.c.b16 %v1414, %v1412
        %v1451 = vpack.c.b16 %v1417, %v1415
        %v1452 = vpack.c.b16 %v1418, %v1416
        %v1453 = vpack.c.b16 %v1421, %v1419
        %v1454 = vpack.c.b16 %v1422, %v1420
        %1487 = vmatprep.subr.bf16.mxu0 %v1424
        %1488 = vmatpush1.bf16.msra.mxu0 %v1423
        %1489 = vmatprep.subr.bf16.mxu0 %v1426
        %1490 = vmatpush1.bf16.msra.mxu0 %v1425
        %1491 = vmatprep.subr.bf16.mxu0 %v1428
        %1492 = vmatpush1.bf16.msra.mxu0 %v1427
        %1493 = vmatprep.subr.bf16.mxu0 %v1430
        %1494 = vmatpush1.bf16.msra.mxu0 %v1429
        %1495 = vmatprep.subr.bf16.mxu0 %v1432
        %1496 = vmatpush1.bf16.msra.mxu0 %v1431
        %1497 = vmatprep.subr.bf16.mxu0 %v1434
        %1498 = vmatpush1.bf16.msra.mxu0 %v1433
        %1499 = vmatprep.subr.bf16.mxu0 %v1436
        %1500 = vmatpush1.bf16.msra.mxu0 %v1435
        %1501 = vmatprep.subr.bf16.mxu0 %v1438
        %1502 = vmatpush1.bf16.msra.mxu0 %v1437
        %1503 = vmatprep.subr.bf16.mxu0 %v1440
        %1504 = vmatpush1.bf16.msra.mxu0 %v1439
        %1505 = vmatprep.subr.bf16.mxu0 %v1442
        %1506 = vmatpush1.bf16.msra.mxu0 %v1441
        %1507 = vmatprep.subr.bf16.mxu0 %v1444
        %1508 = vmatpush1.bf16.msra.mxu0 %v1443
        %1509 = vmatprep.subr.bf16.mxu0 %v1446
        %1510 = vmatpush1.bf16.msra.mxu0 %v1445
        %1511 = vmatprep.subr.bf16.mxu0 %v1448
        %1512 = vmatpush1.bf16.msra.mxu0 %v1447
        %1513 = vmatprep.subr.bf16.mxu0 %v1450
        %1514 = vmatpush1.bf16.msra.mxu0 %v1449
        %1515 = vmatprep.subr.bf16.mxu0 %v1452
        %1516 = vmatpush1.bf16.msra.mxu0 %v1451
        %1517 = vmatprep.subr.bf16.mxu0 %v1454
        %1518 = vmatpush1.bf16.msra.mxu0 %v1453
        %1519 = vmatprep.mubr.bf16.mxu0 %v1316
        %1520 = vmatmul.mubr.bf16.gmra.mrb[0].mxu0 %v1315
        %v1521 = vpop.f32.mrb[0].mxu0
        %v1522 = vadd.f32 0.0, %v1521
        %v1523 = vpop.f32.mrb[0].mxu0
        %v1524 = vadd.f32 0.0, %v1523
        %v1525 = vpop.f32.mrb[0].mxu0
        %v1526 = vadd.f32 0.0, %v1525
        %v1527 = vpop.f32.mrb[0].mxu0
        %v1528 = vadd.f32 0.0, %v1527
        %1529 = vmatprep.mubr.bf16.mxu0 %v1318
        %1530 = vmatmul.mubr.bf16.gmra.mrb[0].mxu0 %v1317
        %v1531 = vpop.f32.mrb[0].mxu0
        %v1532 = vadd.f32 0.0, %v1531
        %v1533 = vpop.f32.mrb[0].mxu0
        %v1534 = vadd.f32 0.0, %v1533
        %v1535 = vpop.f32.mrb[0].mxu0
        %v1536 = vadd.f32 0.0, %v1535
        %v1537 = vpop.f32.mrb[0].mxu0
        %v1538 = vadd.f32 0.0, %v1537
        %1539 = vmatprep.mubr.bf16.mxu0 %v1320
        %1540 = vmatmul.mubr.bf16.gmra.mrb[0].mxu0 %v1319
        %v1541 = vpop.f32.mrb[0].mxu0
        %v1542 = vadd.f32 0.0, %v1541
        %v1543 = vpop.f32.mrb[0].mxu0
        %v1544 = vadd.f32 0.0, %v1543
        %v1545 = vpop.f32.mrb[0].mxu0
        %v1546 = vpop.f32.mrb[0].mxu0
        %1547 = vdwg.mxu0
        %v1548 = vadd.f32 %v1253, %v1522
        %v1549 = vadd.f32 %v1254, %v1524
        %v1550 = vadd.f32 %v1255, %v1526
        %v1551 = vadd.f32 %v1256, %v1528
        %v1552 = vadd.f32 %v1257, %v1532
        %v1553 = vadd.f32 %v1258, %v1534
        %v1554 = vadd.f32 %v1259, %v1536
        %v1555 = vadd.f32 %v1260, %v1538
        %v1556 = vadd.f32 %v1261, %v1542
        %v1557 = vadd.f32 %v1262, %v1544
        %1558 = vst [vmem:[#allocation4] sm:$0xff] %v1548
        %1559 = vst [vmem:[#allocation4 + $0x8] sm:$0xff] %v1549
        %1560 = vst [vmem:[#allocation4 + $0x10] sm:$0xff] %v1550
        %1561 = vst [vmem:[#allocation4 + $0x18] sm:$0xff] %v1551
        %1562 = vst [vmem:[#allocation4 + $0x20] sm:$0xff] %v1552
        %1563 = vst [vmem:[#allocation4 + $0x28] sm:$0xff] %v1553
        %1564 = vst [vmem:[#allocation4 + $0x30] sm:$0xff] %v1554
        %1565 = vst [vmem:[#allocation4 + $0x38] sm:$0xff] %v1555
        %1566 = vst [vmem:[#allocation4 + $0x40] sm:$0x7] %v1556
        %1567 = vst [vmem:[#allocation4 + $0x48] sm:$0x7] %v1557
        %v1568 = vld [vmem:[#allocation4] sm:$0xff]
        %v1569 = vld [vmem:[#allocation4 + $0x8] sm:$0xff]
        %v1570 = vld [vmem:[#allocation4 + $0x10] sm:$0xff]
        %v1571 = vld [vmem:[#allocation4 + $0x18] sm:$0xff]
        %v1572 = vld [vmem:[#allocation4 + $0x20] sm:$0xff]
        %v1573 = vld [vmem:[#allocation4 + $0x28] sm:$0xff]
        %v1574 = vld [vmem:[#allocation4 + $0x30] sm:$0xff]
        %v1575 = vld [vmem:[#allocation4 + $0x38] sm:$0xff]
        %v1576 = vld [vmem:[#allocation4 + $0x40] sm:$0x7]
        %v1577 = vld [vmem:[#allocation4 + $0x48] sm:$0x7]
        %v1578 = vld [vmem:[#allocation3] sm:$0xff]
        %v1579 = vld [vmem:[#allocation3 + $0x8] sm:$0xff]
        %v1580 = vld [vmem:[#allocation3 + $0x10] sm:$0xff]
        %v1581 = vld [vmem:[#allocation3 + $0x18] sm:$0xff]
        %v1582 = vld [vmem:[#allocation3 + $0x20] sm:$0x33]
        %s1583 = scalar_lea.vmem %s347, 256
        %v1584 = vld [vmem:[%s1583] sm:$0xff]
        %v1585 = vld [vmem:[%s1583 + $0x8] sm:$0xff]
        %v1586 = vld [vmem:[%s1583 + $0x10] sm:$0xff]
        %v1587 = vld [vmem:[%s1583 + $0x18] sm:$0xff]
        %v1588 = vld [vmem:[%s1583 + $0x20] sm:$0xff]
        %v1589 = vld [vmem:[%s1583 + $0x28] sm:$0xff]
        %v1590 = vld [vmem:[%s1583 + $0x30] sm:$0xff]
        %v1591 = vld [vmem:[%s1583 + $0x38] sm:$0xff]
        %v1592 = vld [vmem:[%s1583 + $0x40] sm:$0xff]
        %v1593 = vld [vmem:[%s1583 + $0x48] sm:$0xff]
        %v1594 = vld [vmem:[%s1583 + $0x50] sm:$0xff]
        %v1595 = vld [vmem:[%s1583 + $0x58] sm:$0xff]
        %v1596 = vld [vmem:[%s1583 + $0x60] sm:$0xff]
        %v1597 = vld [vmem:[%s1583 + $0x68] sm:$0xff]
        %v1598 = vld [vmem:[%s1583 + $0x70] sm:$0xff]
        %v1599 = vld [vmem:[%s1583 + $0x78] sm:$0xff]
        %v1600 = vld [vmem:[%s1583 + $0x80] sm:$0xff]
        %v1601 = vld [vmem:[%s1583 + $0x88] sm:$0xff]
        %v1602 = vld [vmem:[%s1583 + $0x90] sm:$0xff]
        %v1603 = vld [vmem:[%s1583 + $0x98] sm:$0xff]
        %v1604 = vld [vmem:[%s1583 + $0xa0] sm:$0xff]
        %v1605 = vld [vmem:[%s1583 + $0xa8] sm:$0xff]
        %v1606 = vld [vmem:[%s1583 + $0xb0] sm:$0xff]
        %v1607 = vld [vmem:[%s1583 + $0xb8] sm:$0xff]
        %v1608 = vld [vmem:[%s1583 + $0xc0] sm:$0xff]
        %v1609 = vld [vmem:[%s1583 + $0xc8] sm:$0xff]
        %v1610 = vld [vmem:[%s1583 + $0xd0] sm:$0xff]
        %v1611 = vld [vmem:[%s1583 + $0xd8] sm:$0xff]
        %v1612 = vld [vmem:[%s1583 + $0xe0] sm:$0xff]
        %v1613 = vld [vmem:[%s1583 + $0xe8] sm:$0xff]
        %v1614 = vld [vmem:[%s1583 + $0xf0] sm:$0xff]
        %v1615 = vld [vmem:[%s1583 + $0xf8] sm:$0xff]
        %v1621 = vunpack.c.l.b16 %v1578
        %v1622 = vunpack.c.h.b16 %v1578
        %v1623 = vunpack.c.l.b16 %v1579
        %v1624 = vunpack.c.h.b16 %v1579
        %v1625 = vunpack.c.l.b16 %v1580
        %v1626 = vunpack.c.h.b16 %v1580
        %v1627 = vunpack.c.l.b16 %v1581
        %v1628 = vunpack.c.h.b16 %v1581
        %v1629 = vunpack.c.l.b16 %v1582
        %v1630 = vunpack.c.h.b16 %v1582
        %v1631 = vpack.c.b16 %v1623, %v1621
        %v1632 = vpack.c.b16 %v1624, %v1622
        %v1633 = vpack.c.b16 %v1627, %v1625
        %v1634 = vpack.c.b16 %v1628, %v1626
        %v1635 = vpack.c.b16 %v1629, %v1629
        %v1636 = vpack.c.b16 %v1630, %v1630
        %v1638 = vshrl.u32 %v1631, 16
        %v1640 = vshll.u32 %v1631, 16
        %v1642 = vrot.slane %v1640, 1
        %v1643 = vor.u32 %v1638, %v1642
        %v1645 = vshll.u32 %v1633, 16
        %v1647 = vrot.slane %v1645, 1
        %v1648 = vsel %vm686, %v1643, %v1647
        %v1650 = vshrl.u32 %v1632, 16
        %v1652 = vshll.u32 %v1632, 16
        %v1654 = vrot.slane %v1652, 1
        %v1655 = vor.u32 %v1650, %v1654
        %v1657 = vshll.u32 %v1634, 16
        %v1659 = vrot.slane %v1657, 1
        %v1660 = vsel %vm686, %v1655, %v1659
        %v1661 = vshrl.u32 %v1633, 16
        %v1663 = vor.u32 %v1661, %v1647
        %v1665 = vshll.u32 %v1635, 16
        %v1667 = vrot.slane %v1665, 1
        %v1668 = vsel %vm686, %v1663, %v1667
        %v1669 = vshrl.u32 %v1634, 16
        %v1671 = vor.u32 %v1669, %v1659
        %v1673 = vshll.u32 %v1636, 16
        %v1675 = vrot.slane %v1673, 1
        %v1676 = vsel %vm686, %v1671, %v1675
        %v1677 = vshrl.u32 %v1635, 16
        %v1679 = vor.u32 %v1677, %v1667
        %v1680 = vshrl.u32 %v1636, 16
        %v1682 = vor.u32 %v1680, %v1675
        %v1721 = vunpack.c.l.b16 %v1584
        %v1722 = vunpack.c.h.b16 %v1584
        %v1723 = vunpack.c.l.b16 %v1585
        %v1724 = vunpack.c.h.b16 %v1585
        %v1725 = vunpack.c.l.b16 %v1586
        %v1726 = vunpack.c.h.b16 %v1586
        %v1727 = vunpack.c.l.b16 %v1587
        %v1728 = vunpack.c.h.b16 %v1587
        %v1729 = vunpack.c.l.b16 %v1588
        %v1730 = vunpack.c.h.b16 %v1588
        %v1731 = vunpack.c.l.b16 %v1589
        %v1732 = vunpack.c.h.b16 %v1589
        %v1733 = vunpack.c.l.b16 %v1590
        %v1734 = vunpack.c.h.b16 %v1590
        %v1735 = vunpack.c.l.b16 %v1591
        %v1736 = vunpack.c.h.b16 %v1591
        %v1737 = vunpack.c.l.b16 %v1592
        %v1738 = vunpack.c.h.b16 %v1592
        %v1739 = vunpack.c.l.b16 %v1593
        %v1740 = vunpack.c.h.b16 %v1593
        %v1741 = vunpack.c.l.b16 %v1594
        %v1742 = vunpack.c.h.b16 %v1594
        %v1743 = vunpack.c.l.b16 %v1595
        %v1744 = vunpack.c.h.b16 %v1595
        %v1745 = vunpack.c.l.b16 %v1596
        %v1746 = vunpack.c.h.b16 %v1596
        %v1747 = vunpack.c.l.b16 %v1597
        %v1748 = vunpack.c.h.b16 %v1597
        %v1749 = vunpack.c.l.b16 %v1598
        %v1750 = vunpack.c.h.b16 %v1598
        %v1751 = vunpack.c.l.b16 %v1599
        %v1752 = vunpack.c.h.b16 %v1599
        %v1753 = vunpack.c.l.b16 %v1600
        %v1754 = vunpack.c.h.b16 %v1600
        %v1755 = vunpack.c.l.b16 %v1601
        %v1756 = vunpack.c.h.b16 %v1601
        %v1757 = vunpack.c.l.b16 %v1602
        %v1758 = vunpack.c.h.b16 %v1602
        %v1759 = vunpack.c.l.b16 %v1603
        %v1760 = vunpack.c.h.b16 %v1603
        %v1761 = vunpack.c.l.b16 %v1604
        %v1762 = vunpack.c.h.b16 %v1604
        %v1763 = vunpack.c.l.b16 %v1605
        %v1764 = vunpack.c.h.b16 %v1605
        %v1765 = vunpack.c.l.b16 %v1606
        %v1766 = vunpack.c.h.b16 %v1606
        %v1767 = vunpack.c.l.b16 %v1607
        %v1768 = vunpack.c.h.b16 %v1607
        %v1769 = vunpack.c.l.b16 %v1608
        %v1770 = vunpack.c.h.b16 %v1608
        %v1771 = vunpack.c.l.b16 %v1609
        %v1772 = vunpack.c.h.b16 %v1609
        %v1773 = vunpack.c.l.b16 %v1610
        %v1774 = vunpack.c.h.b16 %v1610
        %v1775 = vunpack.c.l.b16 %v1611
        %v1776 = vunpack.c.h.b16 %v1611
        %v1777 = vunpack.c.l.b16 %v1612
        %v1778 = vunpack.c.h.b16 %v1612
        %v1779 = vunpack.c.l.b16 %v1613
        %v1780 = vunpack.c.h.b16 %v1613
        %v1781 = vunpack.c.l.b16 %v1614
        %v1782 = vunpack.c.h.b16 %v1614
        %v1783 = vunpack.c.l.b16 %v1615
        %v1784 = vunpack.c.h.b16 %v1615
        %v1785 = vpack.c.b16 %v1723, %v1721
        %v1786 = vpack.c.b16 %v1724, %v1722
        %v1787 = vpack.c.b16 %v1727, %v1725
        %v1788 = vpack.c.b16 %v1728, %v1726
        %v1789 = vpack.c.b16 %v1731, %v1729
        %v1790 = vpack.c.b16 %v1732, %v1730
        %v1791 = vpack.c.b16 %v1735, %v1733
        %v1792 = vpack.c.b16 %v1736, %v1734
        %v1793 = vpack.c.b16 %v1739, %v1737
        %v1794 = vpack.c.b16 %v1740, %v1738
        %v1795 = vpack.c.b16 %v1743, %v1741
        %v1796 = vpack.c.b16 %v1744, %v1742
        %v1797 = vpack.c.b16 %v1747, %v1745
        %v1798 = vpack.c.b16 %v1748, %v1746
        %v1799 = vpack.c.b16 %v1751, %v1749
        %v1800 = vpack.c.b16 %v1752, %v1750
        %v1801 = vpack.c.b16 %v1755, %v1753
        %v1802 = vpack.c.b16 %v1756, %v1754
        %v1803 = vpack.c.b16 %v1759, %v1757
        %v1804 = vpack.c.b16 %v1760, %v1758
        %v1805 = vpack.c.b16 %v1763, %v1761
        %v1806 = vpack.c.b16 %v1764, %v1762
        %v1807 = vpack.c.b16 %v1767, %v1765
        %v1808 = vpack.c.b16 %v1768, %v1766
        %v1809 = vpack.c.b16 %v1771, %v1769
        %v1810 = vpack.c.b16 %v1772, %v1770
        %v1811 = vpack.c.b16 %v1775, %v1773
        %v1812 = vpack.c.b16 %v1776, %v1774
        %v1813 = vpack.c.b16 %v1779, %v1777
        %v1814 = vpack.c.b16 %v1780, %v1778
        %v1815 = vpack.c.b16 %v1783, %v1781
        %v1816 = vpack.c.b16 %v1784, %v1782
        %1849 = vmatprep.subr.bf16.mxu0 %v1786
        %1850 = vmatpush1.bf16.msra.mxu0 %v1785
        %1851 = vmatprep.subr.bf16.mxu0 %v1788
        %1852 = vmatpush1.bf16.msra.mxu0 %v1787
        %1853 = vmatprep.subr.bf16.mxu0 %v1790
        %1854 = vmatpush1.bf16.msra.mxu0 %v1789
        %1855 = vmatprep.subr.bf16.mxu0 %v1792
        %1856 = vmatpush1.bf16.msra.mxu0 %v1791
        %1857 = vmatprep.subr.bf16.mxu0 %v1794
        %1858 = vmatpush1.bf16.msra.mxu0 %v1793
        %1859 = vmatprep.subr.bf16.mxu0 %v1796
        %1860 = vmatpush1.bf16.msra.mxu0 %v1795
        %1861 = vmatprep.subr.bf16.mxu0 %v1798
        %1862 = vmatpush1.bf16.msra.mxu0 %v1797
        %1863 = vmatprep.subr.bf16.mxu0 %v1800
        %1864 = vmatpush1.bf16.msra.mxu0 %v1799
        %1865 = vmatprep.subr.bf16.mxu0 %v1802
        %1866 = vmatpush1.bf16.msra.mxu0 %v1801
        %1867 = vmatprep.subr.bf16.mxu0 %v1804
        %1868 = vmatpush1.bf16.msra.mxu0 %v1803
        %1869 = vmatprep.subr.bf16.mxu0 %v1806
        %1870 = vmatpush1.bf16.msra.mxu0 %v1805
        %1871 = vmatprep.subr.bf16.mxu0 %v1808
        %1872 = vmatpush1.bf16.msra.mxu0 %v1807
        %1873 = vmatprep.subr.bf16.mxu0 %v1810
        %1874 = vmatpush1.bf16.msra.mxu0 %v1809
        %1875 = vmatprep.subr.bf16.mxu0 %v1812
        %1876 = vmatpush1.bf16.msra.mxu0 %v1811
        %1877 = vmatprep.subr.bf16.mxu0 %v1814
        %1878 = vmatpush1.bf16.msra.mxu0 %v1813
        %1879 = vmatprep.subr.bf16.mxu0 %v1816
        %1880 = vmatpush1.bf16.msra.mxu0 %v1815
        %1881 = vmatprep.mubr.bf16.mxu0 %v1660
        %1882 = vmatmul.mubr.bf16.gmra.mrb[0].mxu0 %v1648
        %v1883 = vpop.f32.mrb[0].mxu0
        %v1884 = vadd.f32 0.0, %v1883
        %v1885 = vpop.f32.mrb[0].mxu0
        %v1886 = vadd.f32 0.0, %v1885
        %v1887 = vpop.f32.mrb[0].mxu0
        %v1888 = vadd.f32 0.0, %v1887
        %v1889 = vpop.f32.mrb[0].mxu0
        %v1890 = vadd.f32 0.0, %v1889
        %1891 = vmatprep.mubr.bf16.mxu0 %v1676
        %1892 = vmatmul.mubr.bf16.gmra.mrb[0].mxu0 %v1668
        %v1893 = vpop.f32.mrb[0].mxu0
        %v1894 = vadd.f32 0.0, %v1893
        %v1895 = vpop.f32.mrb[0].mxu0
        %v1896 = vadd.f32 0.0, %v1895
        %v1897 = vpop.f32.mrb[0].mxu0
        %v1898 = vadd.f32 0.0, %v1897
        %v1899 = vpop.f32.mrb[0].mxu0
        %v1900 = vadd.f32 0.0, %v1899
        %1901 = vmatprep.mubr.bf16.mxu0 %v1682
        %1902 = vmatmul.mubr.bf16.gmra.mrb[0].mxu0 %v1679
        %v1903 = vpop.f32.mrb[0].mxu0
        %v1904 = vadd.f32 0.0, %v1903
        %v1905 = vpop.f32.mrb[0].mxu0
        %v1906 = vadd.f32 0.0, %v1905
        %v1907 = vpop.f32.mrb[0].mxu0
        %v1908 = vpop.f32.mrb[0].mxu0
        %1909 = vdwg.mxu0
        %v1910 = vadd.f32 %v1568, %v1884
        %v1911 = vadd.f32 %v1569, %v1886
        %v1912 = vadd.f32 %v1570, %v1888
        %v1913 = vadd.f32 %v1571, %v1890
        %v1914 = vadd.f32 %v1572, %v1894
        %v1915 = vadd.f32 %v1573, %v1896
        %v1916 = vadd.f32 %v1574, %v1898
        %v1917 = vadd.f32 %v1575, %v1900
        %v1918 = vadd.f32 %v1576, %v1904
        %v1919 = vadd.f32 %v1577, %v1906
        %1920 = vst [vmem:[#allocation4] sm:$0xff] %v1910
        %1921 = vst [vmem:[#allocation4 + $0x8] sm:$0xff] %v1911
        %1922 = vst [vmem:[#allocation4 + $0x10] sm:$0xff] %v1912
        %1923 = vst [vmem:[#allocation4 + $0x18] sm:$0xff] %v1913
        %1924 = vst [vmem:[#allocation4 + $0x20] sm:$0xff] %v1914
        %1925 = vst [vmem:[#allocation4 + $0x28] sm:$0xff] %v1915
        %1926 = vst [vmem:[#allocation4 + $0x30] sm:$0xff] %v1916
        %1927 = vst [vmem:[#allocation4 + $0x38] sm:$0xff] %v1917
        %1928 = vst [vmem:[#allocation4 + $0x40] sm:$0x7] %v1918
        %1929 = vst [vmem:[#allocation4 + $0x48] sm:$0x7] %v1919
        %v1930 = vld [vmem:[#allocation4] sm:$0xff]
        %v1931 = vld [vmem:[#allocation4 + $0x8] sm:$0xff]
        %v1932 = vld [vmem:[#allocation4 + $0x10] sm:$0xff]
        %v1933 = vld [vmem:[#allocation4 + $0x18] sm:$0xff]
        %v1934 = vld [vmem:[#allocation4 + $0x20] sm:$0xff]
        %v1935 = vld [vmem:[#allocation4 + $0x28] sm:$0xff]
        %v1936 = vld [vmem:[#allocation4 + $0x30] sm:$0xff]
        %v1937 = vld [vmem:[#allocation4 + $0x38] sm:$0xff]
        %v1938 = vld [vmem:[#allocation4 + $0x40] sm:$0x7]
        %v1939 = vld [vmem:[#allocation4 + $0x48] sm:$0x7]
        %v1940 = vld [vmem:[#allocation3] sm:$0xee]
        %v1941 = vld [vmem:[#allocation3 + $0x8] sm:$0xff]
        %v1942 = vld [vmem:[#allocation3 + $0x10] sm:$0xff]
        %v1943 = vld [vmem:[#allocation3 + $0x18] sm:$0xff]
        %v1944 = vld [vmem:[#allocation3 + $0x20] sm:$0x77]
        %s1945 = scalar_lea.vmem %s347, 512
        %v1946 = vld [vmem:[%s1945] sm:$0xff]
        %v1947 = vld [vmem:[%s1945 + $0x8] sm:$0xff]
        %v1948 = vld [vmem:[%s1945 + $0x10] sm:$0xff]
        %v1949 = vld [vmem:[%s1945 + $0x18] sm:$0xff]
        %v1950 = vld [vmem:[%s1945 + $0x20] sm:$0xff]
        %v1951 = vld [vmem:[%s1945 + $0x28] sm:$0xff]
        %v1952 = vld [vmem:[%s1945 + $0x30] sm:$0xff]
        %v1953 = vld [vmem:[%s1945 + $0x38] sm:$0xff]
        %v1954 = vld [vmem:[%s1945 + $0x40] sm:$0xff]
        %v1955 = vld [vmem:[%s1945 + $0x48] sm:$0xff]
        %v1956 = vld [vmem:[%s1945 + $0x50] sm:$0xff]
        %v1957 = vld [vmem:[%s1945 + $0x58] sm:$0xff]
        %v1958 = vld [vmem:[%s1945 + $0x60] sm:$0xff]
        %v1959 = vld [vmem:[%s1945 + $0x68] sm:$0xff]
        %v1960 = vld [vmem:[%s1945 + $0x70] sm:$0xff]
        %v1961 = vld [vmem:[%s1945 + $0x78] sm:$0xff]
        %v1962 = vld [vmem:[%s1945 + $0x80] sm:$0xff]
        %v1963 = vld [vmem:[%s1945 + $0x88] sm:$0xff]
        %v1964 = vld [vmem:[%s1945 + $0x90] sm:$0xff]
        %v1965 = vld [vmem:[%s1945 + $0x98] sm:$0xff]
        %v1966 = vld [vmem:[%s1945 + $0xa0] sm:$0xff]
        %v1967 = vld [vmem:[%s1945 + $0xa8] sm:$0xff]
        %v1968 = vld [vmem:[%s1945 + $0xb0] sm:$0xff]
        %v1969 = vld [vmem:[%s1945 + $0xb8] sm:$0xff]
        %v1970 = vld [vmem:[%s1945 + $0xc0] sm:$0xff]
        %v1971 = vld [vmem:[%s1945 + $0xc8] sm:$0xff]
        %v1972 = vld [vmem:[%s1945 + $0xd0] sm:$0xff]
        %v1973 = vld [vmem:[%s1945 + $0xd8] sm:$0xff]
        %v1974 = vld [vmem:[%s1945 + $0xe0] sm:$0xff]
        %v1975 = vld [vmem:[%s1945 + $0xe8] sm:$0xff]
        %v1976 = vld [vmem:[%s1945 + $0xf0] sm:$0xff]
        %v1977 = vld [vmem:[%s1945 + $0xf8] sm:$0xff]
        %v1983 = vunpack.c.l.b16 %v1940
        %v1984 = vunpack.c.h.b16 %v1940
        %v1985 = vunpack.c.l.b16 %v1941
        %v1986 = vunpack.c.h.b16 %v1941
        %v1987 = vunpack.c.l.b16 %v1942
        %v1988 = vunpack.c.h.b16 %v1942
        %v1989 = vunpack.c.l.b16 %v1943
        %v1990 = vunpack.c.h.b16 %v1943
        %v1991 = vunpack.c.l.b16 %v1944
        %v1992 = vunpack.c.h.b16 %v1944
        %v1993 = vpack.c.b16 %v1985, %v1983
        %v1994 = vpack.c.b16 %v1986, %v1984
        %v1995 = vpack.c.b16 %v1989, %v1987
        %v1996 = vpack.c.b16 %v1990, %v1988
        %v1997 = vpack.c.b16 %v1991, %v1991
        %v1998 = vpack.c.b16 %v1992, %v1992
        %v1999 = vrot.slane %v1993, 1
        %v2000 = vrot.slane %v1995, 1
        %v2001 = vsel %vm919, %v1999, %v2000
        %v2002 = vrot.slane %v1994, 1
        %v2003 = vrot.slane %v1996, 1
        %v2004 = vsel %vm919, %v2002, %v2003
        %v2005 = vrot.slane %v1997, 1
        %v2006 = vsel %vm919, %v2000, %v2005
        %v2007 = vrot.slane %v1998, 1
        %v2008 = vsel %vm919, %v2003, %v2007
        %v2047 = vunpack.c.l.b16 %v1946
        %v2048 = vunpack.c.h.b16 %v1946
        %v2049 = vunpack.c.l.b16 %v1947
        %v2050 = vunpack.c.h.b16 %v1947
        %v2051 = vunpack.c.l.b16 %v1948
        %v2052 = vunpack.c.h.b16 %v1948
        %v2053 = vunpack.c.l.b16 %v1949
        %v2054 = vunpack.c.h.b16 %v1949
        %v2055 = vunpack.c.l.b16 %v1950
        %v2056 = vunpack.c.h.b16 %v1950
        %v2057 = vunpack.c.l.b16 %v1951
        %v2058 = vunpack.c.h.b16 %v1951
        %v2059 = vunpack.c.l.b16 %v1952
        %v2060 = vunpack.c.h.b16 %v1952
        %v2061 = vunpack.c.l.b16 %v1953
        %v2062 = vunpack.c.h.b16 %v1953
        %v2063 = vunpack.c.l.b16 %v1954
        %v2064 = vunpack.c.h.b16 %v1954
        %v2065 = vunpack.c.l.b16 %v1955
        %v2066 = vunpack.c.h.b16 %v1955
        %v2067 = vunpack.c.l.b16 %v1956
        %v2068 = vunpack.c.h.b16 %v1956
        %v2069 = vunpack.c.l.b16 %v1957
        %v2070 = vunpack.c.h.b16 %v1957
        %v2071 = vunpack.c.l.b16 %v1958
        %v2072 = vunpack.c.h.b16 %v1958
        %v2073 = vunpack.c.l.b16 %v1959
        %v2074 = vunpack.c.h.b16 %v1959
        %v2075 = vunpack.c.l.b16 %v1960
        %v2076 = vunpack.c.h.b16 %v1960
        %v2077 = vunpack.c.l.b16 %v1961
        %v2078 = vunpack.c.h.b16 %v1961
        %v2079 = vunpack.c.l.b16 %v1962
        %v2080 = vunpack.c.h.b16 %v1962
        %v2081 = vunpack.c.l.b16 %v1963
        %v2082 = vunpack.c.h.b16 %v1963
        %v2083 = vunpack.c.l.b16 %v1964
        %v2084 = vunpack.c.h.b16 %v1964
        %v2085 = vunpack.c.l.b16 %v1965
        %v2086 = vunpack.c.h.b16 %v1965
        %v2087 = vunpack.c.l.b16 %v1966
        %v2088 = vunpack.c.h.b16 %v1966
        %v2089 = vunpack.c.l.b16 %v1967
        %v2090 = vunpack.c.h.b16 %v1967
        %v2091 = vunpack.c.l.b16 %v1968
        %v2092 = vunpack.c.h.b16 %v1968
        %v2093 = vunpack.c.l.b16 %v1969
        %v2094 = vunpack.c.h.b16 %v1969
        %v2095 = vunpack.c.l.b16 %v1970
        %v2096 = vunpack.c.h.b16 %v1970
        %v2097 = vunpack.c.l.b16 %v1971
        %v2098 = vunpack.c.h.b16 %v1971
        %v2099 = vunpack.c.l.b16 %v1972
        %v2100 = vunpack.c.h.b16 %v1972
        %v2101 = vunpack.c.l.b16 %v1973
        %v2102 = vunpack.c.h.b16 %v1973
        %v2103 = vunpack.c.l.b16 %v1974
        %v2104 = vunpack.c.h.b16 %v1974
        %v2105 = vunpack.c.l.b16 %v1975
        %v2106 = vunpack.c.h.b16 %v1975
        %v2107 = vunpack.c.l.b16 %v1976
        %v2108 = vunpack.c.h.b16 %v1976
        %v2109 = vunpack.c.l.b16 %v1977
        %v2110 = vunpack.c.h.b16 %v1977
        %v2111 = vpack.c.b16 %v2049, %v2047
        %v2112 = vpack.c.b16 %v2050, %v2048
        %v2113 = vpack.c.b16 %v2053, %v2051
        %v2114 = vpack.c.b16 %v2054, %v2052
        %v2115 = vpack.c.b16 %v2057, %v2055
        %v2116 = vpack.c.b16 %v2058, %v2056
        %v2117 = vpack.c.b16 %v2061, %v2059
        %v2118 = vpack.c.b16 %v2062, %v2060
        %v2119 = vpack.c.b16 %v2065, %v2063
        %v2120 = vpack.c.b16 %v2066, %v2064
        %v2121 = vpack.c.b16 %v2069, %v2067
        %v2122 = vpack.c.b16 %v2070, %v2068
        %v2123 = vpack.c.b16 %v2073, %v2071
        %v2124 = vpack.c.b16 %v2074, %v2072
        %v2125 = vpack.c.b16 %v2077, %v2075
        %v2126 = vpack.c.b16 %v2078, %v2076
        %v2127 = vpack.c.b16 %v2081, %v2079
        %v2128 = vpack.c.b16 %v2082, %v2080
        %v2129 = vpack.c.b16 %v2085, %v2083
        %v2130 = vpack.c.b16 %v2086, %v2084
        %v2131 = vpack.c.b16 %v2089, %v2087
        %v2132 = vpack.c.b16 %v2090, %v2088
        %v2133 = vpack.c.b16 %v2093, %v2091
        %v2134 = vpack.c.b16 %v2094, %v2092
        %v2135 = vpack.c.b16 %v2097, %v2095
        %v2136 = vpack.c.b16 %v2098, %v2096
        %v2137 = vpack.c.b16 %v2101, %v2099
        %v2138 = vpack.c.b16 %v2102, %v2100
        %v2139 = vpack.c.b16 %v2105, %v2103
        %v2140 = vpack.c.b16 %v2106, %v2104
        %v2141 = vpack.c.b16 %v2109, %v2107
        %v2142 = vpack.c.b16 %v2110, %v2108
        %2175 = vmatprep.subr.bf16.mxu0 %v2112
        %2176 = vmatpush1.bf16.msra.mxu0 %v2111
        %2177 = vmatprep.subr.bf16.mxu0 %v2114
        %2178 = vmatpush1.bf16.msra.mxu0 %v2113
        %2179 = vmatprep.subr.bf16.mxu0 %v2116
        %2180 = vmatpush1.bf16.msra.mxu0 %v2115
        %2181 = vmatprep.subr.bf16.mxu0 %v2118
        %2182 = vmatpush1.bf16.msra.mxu0 %v2117
        %2183 = vmatprep.subr.bf16.mxu0 %v2120
        %2184 = vmatpush1.bf16.msra.mxu0 %v2119
        %2185 = vmatprep.subr.bf16.mxu0 %v2122
        %2186 = vmatpush1.bf16.msra.mxu0 %v2121
        %2187 = vmatprep.subr.bf16.mxu0 %v2124
        %2188 = vmatpush1.bf16.msra.mxu0 %v2123
        %2189 = vmatprep.subr.bf16.mxu0 %v2126
        %2190 = vmatpush1.bf16.msra.mxu0 %v2125
        %2191 = vmatprep.subr.bf16.mxu0 %v2128
        %2192 = vmatpush1.bf16.msra.mxu0 %v2127
        %2193 = vmatprep.subr.bf16.mxu0 %v2130
        %2194 = vmatpush1.bf16.msra.mxu0 %v2129
        %2195 = vmatprep.subr.bf16.mxu0 %v2132
        %2196 = vmatpush1.bf16.msra.mxu0 %v2131
        %2197 = vmatprep.subr.bf16.mxu0 %v2134
        %2198 = vmatpush1.bf16.msra.mxu0 %v2133
        %2199 = vmatprep.subr.bf16.mxu0 %v2136
        %2200 = vmatpush1.bf16.msra.mxu0 %v2135
        %2201 = vmatprep.subr.bf16.mxu0 %v2138
        %2202 = vmatpush1.bf16.msra.mxu0 %v2137
        %2203 = vmatprep.subr.bf16.mxu0 %v2140
        %2204 = vmatpush1.bf16.msra.mxu0 %v2139
        %2205 = vmatprep.subr.bf16.mxu0 %v2142
        %2206 = vmatpush1.bf16.msra.mxu0 %v2141
        %2207 = vmatprep.mubr.bf16.mxu0 %v2004
        %2208 = vmatmul.mubr.bf16.gmra.mrb[0].mxu0 %v2001
        %v2209 = vpop.f32.mrb[0].mxu0
        %v2210 = vadd.f32 0.0, %v2209
        %v2211 = vpop.f32.mrb[0].mxu0
        %v2212 = vadd.f32 0.0, %v2211
        %v2213 = vpop.f32.mrb[0].mxu0
        %v2214 = vadd.f32 0.0, %v2213
        %v2215 = vpop.f32.mrb[0].mxu0
        %v2216 = vadd.f32 0.0, %v2215
        %2217 = vmatprep.mubr.bf16.mxu0 %v2008
        %2218 = vmatmul.mubr.bf16.gmra.mrb[0].mxu0 %v2006
        %v2219 = vpop.f32.mrb[0].mxu0
        %v2220 = vadd.f32 0.0, %v2219
        %v2221 = vpop.f32.mrb[0].mxu0
        %v2222 = vadd.f32 0.0, %v2221
        %v2223 = vpop.f32.mrb[0].mxu0
        %v2224 = vadd.f32 0.0, %v2223
        %v2225 = vpop.f32.mrb[0].mxu0
        %v2226 = vadd.f32 0.0, %v2225
        %2227 = vmatprep.mubr.bf16.mxu0 %v2007
        %2228 = vmatmul.mubr.bf16.gmra.mrb[0].mxu0 %v2005
        %v2229 = vpop.f32.mrb[0].mxu0
        %v2230 = vadd.f32 0.0, %v2229
        %v2231 = vpop.f32.mrb[0].mxu0
        %v2232 = vadd.f32 0.0, %v2231
        %v2233 = vpop.f32.mrb[0].mxu0
        %v2234 = vpop.f32.mrb[0].mxu0
        %2235 = vdwg.mxu0
        %v2236 = vadd.f32 %v1930, %v2210
        %v2237 = vadd.f32 %v1931, %v2212
        %v2238 = vadd.f32 %v1932, %v2214
        %v2239 = vadd.f32 %v1933, %v2216
        %v2240 = vadd.f32 %v1934, %v2220
        %v2241 = vadd.f32 %v1935, %v2222
        %v2242 = vadd.f32 %v1936, %v2224
        %v2243 = vadd.f32 %v1937, %v2226
        %v2244 = vadd.f32 %v1938, %v2230
        %v2245 = vadd.f32 %v1939, %v2232
        %2246 = vst [vmem:[#allocation4] sm:$0xff] %v2236
        %2247 = vst [vmem:[#allocation4 + $0x8] sm:$0xff] %v2237
        %2248 = vst [vmem:[#allocation4 + $0x10] sm:$0xff] %v2238
        %2249 = vst [vmem:[#allocation4 + $0x18] sm:$0xff] %v2239
        %2250 = vst [vmem:[#allocation4 + $0x20] sm:$0xff] %v2240
        %2251 = vst [vmem:[#allocation4 + $0x28] sm:$0xff] %v2241
        %2252 = vst [vmem:[#allocation4 + $0x30] sm:$0xff] %v2242
        %2253 = vst [vmem:[#allocation4 + $0x38] sm:$0xff] %v2243
        %2254 = vst [vmem:[#allocation4 + $0x40] sm:$0x7] %v2244
        %2255 = vst [vmem:[#allocation4 + $0x48] sm:$0x7] %v2245
        %v2256 = vld [vmem:[#allocation4] sm:$0xfe]
        %v2257 = vld [vmem:[#allocation4 + $0x8] sm:$0xfe]
        %v2258 = vld [vmem:[#allocation4 + $0x10] sm:$0xff]
        %v2259 = vld [vmem:[#allocation4 + $0x18] sm:$0xff]
        %v2260 = vld [vmem:[#allocation4 + $0x20] sm:$0x1]
        %v2261 = vld [vmem:[#allocation4 + $0x28] sm:$0x1]
        %v2262 = vmul.f32 %v2256, 0.2
        %v2263 = vmul.f32 %v2257, 0.2
        %v2264 = vmul.f32 %v2258, 0.2
        %v2265 = vmul.f32 %v2259, 0.2
        %v2266 = vmul.f32 %v2260, 0.2
        %v2267 = vmul.f32 %v2261, 0.2
        %v2268 = vmax.f32 %v2256, %v2262
        %v2269 = vmax.f32 %v2257, %v2263
        %v2270 = vmax.f32 %v2258, %v2264
        %v2271 = vmax.f32 %v2259, %v2265
        %v2272 = vmax.f32 %v2260, %v2266
        %v2273 = vmax.f32 %v2261, %v2267
        %vm2280 = vcmask 1046528
        %v2281 = vrot.slane %v2268, 1
        %v2282 = vrot.slane %v2270, 1
        %v2283 = vsel %vm2280, %v2281, %v2282
        %v2284 = vrot.slane %v2269, 1
        %v2285 = vrot.slane %v2271, 1
        %v2286 = vsel %vm2280, %v2284, %v2285
        %v2287 = vrot.slane %v2272, 1
        %v2288 = vsel %vm2280, %v2282, %v2287
        %v2289 = vrot.slane %v2273, 1
        %v2290 = vsel %vm2280, %v2285, %v2289
        %2295 = vst [vmem:[%s361] sm:$0xff] %v2283
        %2296 = vst [vmem:[%s361 + $0x8] sm:$0xff] %v2286
        %2297 = vst [vmem:[%s361 + $0x10] sm:$0xff] %v2288
        %2298 = vst [vmem:[%s361 + $0x18] sm:$0xff] %v2290
        %v2299 = vld [vmem:[#allocation4 + $0x20] sm:$0xf8]
        %v2300 = vld [vmem:[#allocation4 + $0x28] sm:$0xf8]
        %v2301 = vld [vmem:[#allocation4 + $0x30] sm:$0xff]
        %v2302 = vld [vmem:[#allocation4 + $0x38] sm:$0xff]
        %v2303 = vld [vmem:[#allocation4 + $0x40] sm:$0x7]
        %v2304 = vld [vmem:[#allocation4 + $0x48] sm:$0x7]
        %v2305 = vmul.f32 %v2299, 0.2
        %v2306 = vmul.f32 %v2300, 0.2
        %v2307 = vmul.f32 %v2301, 0.2
        %v2308 = vmul.f32 %v2302, 0.2
        %v2309 = vmul.f32 %v2303, 0.2
        %v2310 = vmul.f32 %v2304, 0.2
        %v2311 = vmax.f32 %v2299, %v2305
        %v2312 = vmax.f32 %v2300, %v2306
        %v2313 = vmax.f32 %v2301, %v2307
        %v2314 = vmax.f32 %v2302, %v2308
        %v2315 = vmax.f32 %v2303, %v2309
        %v2316 = vmax.f32 %v2304, %v2310
        %vm2323 = vcmask 1044480
        %v2324 = vrot.slane %v2311, 3
        %v2325 = vrot.slane %v2313, 3
        %v2326 = vsel %vm2323, %v2324, %v2325
        %v2327 = vrot.slane %v2312, 3
        %v2328 = vrot.slane %v2314, 3
        %v2329 = vsel %vm2323, %v2327, %v2328
        %v2330 = vrot.slane %v2315, 3
        %v2331 = vsel %vm2323, %v2325, %v2330
        %v2332 = vrot.slane %v2316, 3
        %v2333 = vsel %vm2323, %v2328, %v2332
        %s2338 = scalar_lea.vmem %s361, 32
        %2339 = vst [vmem:[%s2338] sm:$0xff] %v2326
        %2340 = vst [vmem:[%s2338 + $0x8] sm:$0xff] %v2329
        %2341 = vst [vmem:[%s2338 + $0x10] sm:$0xff] %v2331
        %2342 = vst [vmem:[%s2338 + $0x18] sm:$0xff] %v2333
        %s2343 = smul.u32 2, %s24
        %p2344 = scmp.lt.s32.totalorder %s23, 2
        %s2345 = scalar_select %p2344, %s23, 2
        %p2346 = scmp.lt.s32.totalorder %s2343, 1
        %s2347 = scalar_select %p2346, %s2343, 1
        %s2348 = smul.addr %s2347, 4
        %s2349 = smul.addr %s2345, 8
        %s2350 = sadd.s32 %s2348, %s2349
        %s2351 = smul.addr %s2350, 8
        %s2352 = scalar_lea.vmem %s5, %s2351
        // Predicated region
        $region45: #{spepy_block_forward.1} parent=39 // pred_check
          %p2353 = pneg %p183
        $region46: #{spepy_block_forward.1} parent=39 // pred_check_branch
          %2355 = sbr.rel (%p2353) target = $region48
        $region47: #{spepy_block_forward.1} parent=39 // pred_region
          %s2356 = smul.u32 2, %s24
        $region48: #{spepy_block_forward.1} parent=39 // pred_fallthru
          _
      $region40: #{spepy_block_forward.1} parent=5 // pred_fallthru
        _
      %p2357 = scmp.le.s32.totalorder 2, %s14
      // Predicated region
      $region49: #{spepy_block_forward.1} parent=5 // pred_check
        %p2358 = pneg %p2357
      $region50: #{spepy_block_forward.1} parent=5 // pred_check_branch
        %2360 = sbr.rel (%p2358) target = $region52
      $region51: #{spepy_block_forward.1} parent=5 // pred_region
        %s2361 = ssub.s32 %s14, 2
        // Predicated region
        $region53: #{spepy_block_forward.1} parent=51 // pred_check
          %p2362 = pneg %p189
        $region54: #{spepy_block_forward.1} parent=51 // pred_check_branch
          %2364 = sbr.rel (%p2362) target = $region56
        $region55: #{spepy_block_forward.1} parent=51 // pred_region
          %s2365 = smul.u32 2, %s26
          %p2366 = scmp.lt.s32.totalorder %s25, 2
          %s2367 = scalar_select %p2366, %s25, 2
          %p2368 = scmp.lt.s32.totalorder %s2365, 1
          %s2369 = scalar_select %p2368, %s2365, 1
          %s2370 = smul.addr %s2369, 4
          %s2371 = smul.addr %s2367, 8
          %s2372 = sadd.s32 %s2370, %s2371
          %s2373 = smul.addr %s2372, 8
          %s2374 = scalar_lea.vmem %s5, %s2373
        $region56: #{spepy_block_forward.1} parent=51 // pred_fallthru
          _
      $region52: #{spepy_block_forward.1} parent=5 // pred_fallthru
        _
    $region6: #{spepy_block_forward.1} parent=1 // loop_footer
      %s18 = sadd.s32 1, %s14
    $region7: #{spepy_block_forward.1} parent=1 // loop_footer_branch
      %13 = sbr.rel target = $region3
    $region8: #{spepy_block_forward.1} parent=1 // loop_exit
      _
    %2375 = vsyncpa [#allocation6], 1
    %s2376 = scalar_lea.sflag [#allocation6], 1
    %2377 = vsyncpa %s2376, 1

</llo_original>
